<compile_context>
chip_gen: v7x
topology: tpu7x:2x2x1
jax: 0.10.0
libtpu: 0.0.40
codegen_flags: <defaults>
</compile_context>

<pallas_src>
import functools

import jax
import jax.numpy as jnp
from jax.experimental import pallas as pl
from jax.experimental.pallas import tpu as pltpu


def _vmem_limit_bytes():
    """Generation-aware VMEM budget: ~3/4 of per-core physical VMEM."""
    try:
        cap = int(pltpu.get_tpu_info().vmem_capacity_bytes)
    except Exception:
        cap = 64 * 1024 * 1024  # conservative fallback (v7x per-TensorCore)
    return cap * 3 // 4


def _compute_y(x_f32, w1_ref, b1_ref, w2_ref, b2_ref):
    """conv1(1x1) -> ReLU -> conv2(1x1) -> + residual, channels-first tile.

    x_f32: (C, tile_l) f32; w1: (H, C) bf16; w2: (C, H) bf16; biases (H,1)/(C,1) f32.
    """
    h = jnp.dot(w1_ref[...], x_f32.astype(jnp.bfloat16),
                preferred_element_type=jnp.float32) + b1_ref[...]
    h = jnp.maximum(h, 0.0)
    y = jnp.dot(w2_ref[...], h.astype(jnp.bfloat16),
                preferred_element_type=jnp.float32) + b2_ref[...] + x_f32
    return y


def _stats_kernel(x_ref, w1_ref, b1_ref, w2_ref, b2_ref,
                  sum_ref, sumsq_ref, *, tile_l, l_true):
    li = pl.program_id(1)

    @pl.when(li == 0)
    def _():
        sum_ref[...] = jnp.zeros_like(sum_ref)
        sumsq_ref[...] = jnp.zeros_like(sumsq_ref)

    x = x_ref[...].astype(jnp.float32)
    y = _compute_y(x, w1_ref, b1_ref, w2_ref, b2_ref)

    ragged = l_true % tile_l
    if ragged:
        # Only emitted when tile_l does not divide L; only the last L-tile has
        # padded lanes, the predicate folds that in (cheap VPU filler).
        lane = jax.lax.broadcasted_iota(jnp.int32, y.shape, 1)
        keep = (li < pl.num_programs(1) - 1) | (lane < ragged)
        y = jnp.where(keep, y, 0.0)

    sum_ref[...] += jnp.sum(y, axis=1, keepdims=True)
    sumsq_ref[...] += jnp.sum(y * y, axis=1, keepdims=True)


def _normalize_kernel(x_ref, w1_ref, b1_ref, w2_ref, b2_ref,
                      scale_ref, shift_ref, o_ref):
    x = x_ref[...].astype(jnp.float32)
    y = _compute_y(x, w1_ref, b1_ref, w2_ref, b2_ref)
    o_ref[...] = (y * scale_ref[...] + shift_ref[...]).astype(o_ref.dtype)


def feed_forward(x_ncl, w1, b1, w2, b2, gamma, beta, *, tile_l=1024, eps=1e-5):
    """x_ncl: (N, C, L) f32 (PyTorch NCL).  w1: (H, C), w2: (C, H) (torch conv weights
    with the trailing kernel_size=1 axis dropped).  Returns (N, C, L).

    BatchNorm semantics are training-mode batch statistics (biased variance).
    """
    N, C, L = x_ncl.shape
    H = w1.shape[0]

    # L tile: full L if it fits, else a multiple of 128 (lane-dense blocks).
    if L <= tile_l:
        tl = L
    else:
        tl = max(128, (tile_l // 128) * 128)
    num_l = pl.cdiv(L, tl)

    f32 = jnp.float32
    w1b = w1.astype(jnp.bfloat16)                 # (H, C)
    w2b = w2.astype(jnp.bfloat16)                 # (C, H)
    b1c = b1.reshape(H, 1).astype(f32)
    b2c = b2.reshape(C, 1).astype(f32)

    # Tiled x/out; weights & per-channel columns resident (constant index_map).
    x_spec = pl.BlockSpec((None, C, tl), lambda n, l: (n, 0, l))
    w1_spec = pl.BlockSpec((H, C), lambda n, l: (0, 0))
    w2_spec = pl.BlockSpec((C, H), lambda n, l: (0, 0))
    bh_spec = pl.BlockSpec((H, 1), lambda n, l: (0, 0))
    bc_spec = pl.BlockSpec((C, 1), lambda n, l: (0, 0))
    stat_spec = pl.BlockSpec((None, C, 1), lambda n, l: (n, 0, 0))

    vmem_limit = _vmem_limit_bytes()
    matmul_flops = 4 * N * L * C * H              # two matmuls per pass
    weight_bytes = 2 * C * H * 2                  # bf16 w1 + w2
    x_bytes = N * C * L * 4

    # ---- pass 1: per-(batch, channel) partial sum / sum-of-squares ----
    sums, sumsqs = pl.pallas_call(
        functools.partial(_stats_kernel, tile_l=tl, l_true=L),
        out_shape=(jax.ShapeDtypeStruct((N, C, 1), f32),
                   jax.ShapeDtypeStruct((N, C, 1), f32)),
        grid_spec=pltpu.PrefetchScalarGridSpec(
            num_scalar_prefetch=0,
            grid=(N, num_l),
            in_specs=[x_spec, w1_spec, bh_spec, w2_spec, bc_spec],
            out_specs=(stat_spec, stat_spec),
        ),
        compiler_params=pltpu.CompilerParams(
            dimension_semantics=("parallel", "arbitrary"),
            vmem_limit_bytes=vmem_limit),
        cost_estimate=pl.CostEstimate(
            flops=matmul_flops, transcendentals=0,
            bytes_accessed=x_bytes + weight_bytes + 2 * N * C * 4),
    )(x_ncl, w1b, b1c, w2b, b2c)

    # ---- fold BatchNorm into per-channel scale/shift (tiny (C,1) ops) ----
    m = N * L
    total = jnp.sum(sums, axis=0)                 # (C, 1)
    total_sq = jnp.sum(sumsqs, axis=0)            # (C, 1)
    mean = total / m
    var = jnp.maximum(total_sq / m - mean * mean, 0.0)   # biased variance
    inv_std = jax.lax.rsqrt(var + eps)
    scale = gamma.reshape(C, 1).astype(f32) * inv_std
    shift = beta.reshape(C, 1).astype(f32) - mean * scale

    # ---- pass 2: recompute y per tile, apply y*scale + shift ----
    out = pl.pallas_call(
        _normalize_kernel,
        out_shape=jax.ShapeDtypeStruct((N, C, L), x_ncl.dtype),
        grid_spec=pltpu.PrefetchScalarGridSpec(
            num_scalar_prefetch=0,
            grid=(N, num_l),
            in_specs=[x_spec, w1_spec, bh_spec, w2_spec, bc_spec,
                      bc_spec, bc_spec],
            out_specs=x_spec,
        ),
        compiler_params=pltpu.CompilerParams(
            dimension_semantics=("parallel", "parallel"),
            vmem_limit_bytes=vmem_limit),
        cost_estimate=pl.CostEstimate(
            flops=matmul_flops, transcendentals=0,
            bytes_accessed=2 * x_bytes + weight_bytes + 2 * C * 4),
    )(x_ncl, w1b, b1c, w2b, b2c, scale, shift)

    return out


def _reference(x, w1, b1, w2, b2, gamma, beta, eps=1e-5):
    """Pure-JAX f32 reference mirroring the torch module (train-mode BN)."""
    h = jnp.einsum('hc,ncl->nhl', w1, x) + b1[None, :, None]
    h = jnp.maximum(h, 0.0)
    y = jnp.einsum('ch,nhl->ncl', w2, h) + b2[None, :, None] + x
    mean = jnp.mean(y, axis=(0, 2), keepdims=True)
    var = jnp.mean((y - mean) ** 2, axis=(0, 2), keepdims=True)
    return (y - mean) / jnp.sqrt(var + eps) * gamma[None, :, None] + beta[None, :, None]


if __name__ == "__main__":
    # Shapes consistent with FeedForward(num_units=[hidden, d_model]); Conv1d input
    # is (batch, d_model, seq).
    batch, seq = 2, 8
    hidden, d_model = 64, 32      # num_units = [64, 32]

    key = jax.random.PRNGKey(0)
    kx, k1, kb1, k2, kb2, kg, kb = jax.random.split(key, 7)

    x = jax.random.normal(kx, (batch, d_model, seq), dtype=jnp.float32)

    # conv1: Conv1d(d_model -> hidden, k=1): weight (hidden, d_model).
    w1 = jax.random.normal(k1, (hidden, d_model), dtype=jnp.float32) * (1.0 / d_model ** 0.5)
    b1 = jax.random.normal(kb1, (hidden,), dtype=jnp.float32) * 0.1
    # conv2: Conv1d(hidden -> d_model, k=1): weight (d_model, hidden).
    w2 = jax.random.normal(k2, (d_model, hidden), dtype=jnp.float32) * (1.0 / hidden ** 0.5)
    b2 = jax.random.normal(kb2, (d_model,), dtype=jnp.float32) * 0.1
    # BatchNorm1d affine params (torch init weight=1, bias=0; perturb to be non-trivial).
    gamma = jnp.ones((d_model,), dtype=jnp.float32) + 0.01 * jax.random.normal(kg, (d_model,))
    beta = 0.01 * jax.random.normal(kb, (d_model,), dtype=jnp.float32)

    ff = jax.jit(feed_forward)
    out = ff(x, w1, b1, w2, b2, gamma, beta)
    jax.block_until_ready(out)
    assert out.shape == (batch, d_model, seq)

    ref = _reference(x, w1, b1, w2, b2, gamma, beta)
    max_err = float(jnp.max(jnp.abs(out - ref)))
    # Loose tolerance: bf16 MXU operands vs f32 reference.
    assert max_err < 1e-1, f"max abs error {max_err}"
    print("KERNEL_OK")
</pallas_src>

<mosaic_0001>
module attributes {stable_mosaic.version = 11 : i64} {
  func.func @_stats_kernel(%arg0: i32, %arg1: i32, %arg2: memref<1x32x8xf32, #tpu.memory_space<vmem>>, %arg3: memref<64x32xbf16, #tpu.memory_space<vmem>>, %arg4: memref<64x1xf32, #tpu.memory_space<vmem>>, %arg5: memref<32x64xbf16, #tpu.memory_space<vmem>>, %arg6: memref<32x1xf32, #tpu.memory_space<vmem>>, %arg7: memref<1x32x1xf32, #tpu.memory_space<vmem>>, %arg8: memref<1x32x1xf32, #tpu.memory_space<vmem>>) attributes {dimension_semantics = [#tpu.dimension_semantics<parallel>, #tpu.dimension_semantics<arbitrary>], iteration_bounds = array<i64: 2, 1>, scalar_prefetch = 0 : i64, scratch_operands = 0 : i64, tpu.core_type = #tpu.core_type<tc>, window_params = [{transform_indices = @transform_0, window_bounds = array<i64: 1, 32, 8>}, {pipeline_mode = #tpu.pipeline_mode<synchronous>, transform_indices = @transform_1, window_bounds = array<i64: 64, 32>}, {pipeline_mode = #tpu.pipeline_mode<synchronous>, transform_indices = @transform_2, window_bounds = array<i64: 64, 1>}, {pipeline_mode = #tpu.pipeline_mode<synchronous>, transform_indices = @transform_3, window_bounds = array<i64: 32, 64>}, {pipeline_mode = #tpu.pipeline_mode<synchronous>, transform_indices = @transform_4, window_bounds = array<i64: 32, 1>}, {transform_indices = @transform_5, window_bounds = array<i64: 1, 32, 1>}, {transform_indices = @transform_6, window_bounds = array<i64: 1, 32, 1>}]} {
    %c0_i32 = arith.constant 0 : i32
    %0 = arith.cmpi eq, %arg1, %c0_i32 : i32
    %1 = arith.extui %0 : i1 to i32
    %c0_i32_0 = arith.constant 0 : i32
    %2 = arith.cmpi ne, %1, %c0_i32_0 : i32
    scf.if %2 {
      %cst_27 = arith.constant 0.000000e+00 : f32
      %37 = vector.broadcast %cst_27 : f32 to vector<32x1xf32>
      %c0_28 = arith.constant 0 : index
      %c0_29 = arith.constant 0 : index
      %c0_30 = arith.constant 0 : index
      %38 = vector.load %arg7[%c0_28, %c0_29, %c0_30] : memref<1x32x1xf32, #tpu.memory_space<vmem>>, vector<1x32x1xf32>
      %39 = vector.shape_cast %38 : vector<1x32x1xf32> to vector<32x1xf32>
      %40 = vector.shape_cast %37 : vector<32x1xf32> to vector<1x32x1xf32>
      tpu.vector_store %arg7[%c0_28, %c0_29, %c0_30], %40 {strides = array<i32>} : memref<1x32x1xf32, #tpu.memory_space<vmem>>, vector<1x32x1xf32>,
      %cst_31 = arith.constant 0.000000e+00 : f32
      %41 = vector.broadcast %cst_31 : f32 to vector<32x1xf32>
      %c0_32 = arith.constant 0 : index
      %c0_33 = arith.constant 0 : index
      %c0_34 = arith.constant 0 : index
      %42 = vector.load %arg8[%c0_32, %c0_33, %c0_34] : memref<1x32x1xf32, #tpu.memory_space<vmem>>, vector<1x32x1xf32>
      %43 = vector.shape_cast %42 : vector<1x32x1xf32> to vector<32x1xf32>
      %44 = vector.shape_cast %41 : vector<32x1xf32> to vector<1x32x1xf32>
      tpu.vector_store %arg8[%c0_32, %c0_33, %c0_34], %44 {strides = array<i32>} : memref<1x32x1xf32, #tpu.memory_space<vmem>>, vector<1x32x1xf32>,
    } else {
    }
    %c0 = arith.constant 0 : index
    %c0_1 = arith.constant 0 : index
    %c0_2 = arith.constant 0 : index
    %3 = vector.load %arg2[%c0, %c0_1, %c0_2] : memref<1x32x8xf32, #tpu.memory_space<vmem>>, vector<1x32x8xf32>
    %4 = vector.shape_cast %3 : vector<1x32x8xf32> to vector<32x8xf32>
    %c0_3 = arith.constant 0 : index
    %c0_4 = arith.constant 0 : index
    %5 = vector.load %arg3[%c0_3, %c0_4] : memref<64x32xbf16, #tpu.memory_space<vmem>>, vector<64x32xbf16>
    %6 = arith.truncf %4 : vector<32x8xf32> to vector<32x8xbf16>
    %cst = arith.constant dense<0.000000e+00> : vector<64x8xf32>
    %7 = tpu.matmul %5, %6, %cst {dimension_numbers = #tpu.dot_dimension_numbers<[1], [0], [0], [1], [0, 0, 1, 1], [], []>} : vector<64x32xbf16>, vector<32x8xbf16>, vector<64x8xf32> -> vector<64x8xf32>
    %c0_5 = arith.constant 0 : index
    %c0_6 = arith.constant 0 : index
    %8 = vector.load %arg4[%c0_5, %c0_6] : memref<64x1xf32, #tpu.memory_space<vmem>>, vector<64x1xf32>
    %9 = vector.broadcast %8 : vector<64x1xf32> to vector<64x8xf32>
    %10 = arith.addf %7, %9 : vector<64x8xf32>
    %cst_7 = arith.constant 0.000000e+00 : f32
    %11 = vector.broadcast %cst_7 : f32 to vector<64x8xf32>
    %12 = arith.maximumf %10, %11 : vector<64x8xf32>
    %c0_8 = arith.constant 0 : index
    %c0_9 = arith.constant 0 : index
    %13 = vector.load %arg5[%c0_8, %c0_9] : memref<32x64xbf16, #tpu.memory_space<vmem>>, vector<32x64xbf16>
    %14 = arith.truncf %12 : vector<64x8xf32> to vector<64x8xbf16>
    %cst_10 = arith.constant dense<0.000000e+00> : vector<32x8xf32>
    %15 = tpu.matmul %13, %14, %cst_10 {dimension_numbers = #tpu.dot_dimension_numbers<[1], [0], [0], [1], [0, 0, 1, 1], [], []>} : vector<32x64xbf16>, vector<64x8xbf16>, vector<32x8xf32> -> vector<32x8xf32>
    %c0_11 = arith.constant 0 : index
    %c0_12 = arith.constant 0 : index
    %16 = vector.load %arg6[%c0_11, %c0_12] : memref<32x1xf32, #tpu.memory_space<vmem>>, vector<32x1xf32>
    %17 = vector.broadcast %16 : vector<32x1xf32> to vector<32x8xf32>
    %18 = arith.addf %15, %17 : vector<32x8xf32>
    %19 = arith.addf %18, %4 : vector<32x8xf32>
    %c0_13 = arith.constant 0 : index
    %c0_14 = arith.constant 0 : index
    %c0_15 = arith.constant 0 : index
    %20 = vector.load %arg7[%c0_13, %c0_14, %c0_15] : memref<1x32x1xf32, #tpu.memory_space<vmem>>, vector<1x32x1xf32>
    %21 = vector.shape_cast %20 : vector<1x32x1xf32> to vector<32x1xf32>
    %cst_16 = arith.constant dense<0.000000e+00> : vector<32xf32>
    %22 = vector.multi_reduction <add>, %19, %cst_16 [1] : vector<32x8xf32> to vector<32xf32>
    %23 = vector.shape_cast %22 : vector<32xf32> to vector<32x1xf32>
    %24 = arith.addf %21, %23 : vector<32x1xf32>
    %c0_17 = arith.constant 0 : index
    %c0_18 = arith.constant 0 : index
    %c0_19 = arith.constant 0 : index
    %25 = vector.load %arg7[%c0_17, %c0_18, %c0_19] : memref<1x32x1xf32, #tpu.memory_space<vmem>>, vector<1x32x1xf32>
    %26 = vector.shape_cast %25 : vector<1x32x1xf32> to vector<32x1xf32>
    %27 = vector.shape_cast %24 : vector<32x1xf32> to vector<1x32x1xf32>
    tpu.vector_store %arg7[%c0_17, %c0_18, %c0_19], %27 {strides = array<i32>} : memref<1x32x1xf32, #tpu.memory_space<vmem>>, vector<1x32x1xf32>,
    %c0_20 = arith.constant 0 : index
    %c0_21 = arith.constant 0 : index
    %c0_22 = arith.constant 0 : index
    %28 = vector.load %arg8[%c0_20, %c0_21, %c0_22] : memref<1x32x1xf32, #tpu.memory_space<vmem>>, vector<1x32x1xf32>
    %29 = vector.shape_cast %28 : vector<1x32x1xf32> to vector<32x1xf32>
    %30 = arith.mulf %19, %19 : vector<32x8xf32>
    %cst_23 = arith.constant dense<0.000000e+00> : vector<32xf32>
    %31 = vector.multi_reduction <add>, %30, %cst_23 [1] : vector<32x8xf32> to vector<32xf32>
    %32 = vector.shape_cast %31 : vector<32xf32> to vector<32x1xf32>
    %33 = arith.addf %29, %32 : vector<32x1xf32>
    %c0_24 = arith.constant 0 : index
    %c0_25 = arith.constant 0 : index
    %c0_26 = arith.constant 0 : index
    %34 = vector.load %arg8[%c0_24, %c0_25, %c0_26] : memref<1x32x1xf32, #tpu.memory_space<vmem>>, vector<1x32x1xf32>
    %35 = vector.shape_cast %34 : vector<1x32x1xf32> to vector<32x1xf32>
    %36 = vector.shape_cast %33 : vector<32x1xf32> to vector<1x32x1xf32>
    tpu.vector_store %arg8[%c0_24, %c0_25, %c0_26], %36 {strides = array<i32>} : memref<1x32x1xf32, #tpu.memory_space<vmem>>, vector<1x32x1xf32>,
    return
  }
  func.func @transform_0(%arg0: i32, %arg1: i32) -> (i32, i32, i32) {
    %c0_i32 = arith.constant 0 : i32
    %c0_i32_0 = arith.constant 0 : i32
    return %arg0, %c0_i32, %arg1 : i32, i32, i32
  }
  func.func @transform_1(%arg0: i32, %arg1: i32) -> (i32, i32) {
    %c0_i32 = arith.constant 0 : i32
    %c0_i32_0 = arith.constant 0 : i32
    %c0_i32_1 = arith.constant 0 : i32
    return %c0_i32, %c0_i32_0 : i32, i32
  }
  func.func @transform_2(%arg0: i32, %arg1: i32) -> (i32, i32) {
    %c0_i32 = arith.constant 0 : i32
    %c0_i32_0 = arith.constant 0 : i32
    %c0_i32_1 = arith.constant 0 : i32
    return %c0_i32, %c0_i32_0 : i32, i32
  }
  func.func @transform_3(%arg0: i32, %arg1: i32) -> (i32, i32) {
    %c0_i32 = arith.constant 0 : i32
    %c0_i32_0 = arith.constant 0 : i32
    %c0_i32_1 = arith.constant 0 : i32
    return %c0_i32, %c0_i32_0 : i32, i32
  }
  func.func @transform_4(%arg0: i32, %arg1: i32) -> (i32, i32) {
    %c0_i32 = arith.constant 0 : i32
    %c0_i32_0 = arith.constant 0 : i32
    %c0_i32_1 = arith.constant 0 : i32
    return %c0_i32, %c0_i32_0 : i32, i32
  }
  func.func @transform_5(%arg0: i32, %arg1: i32) -> (i32, i32, i32) {
    %c0_i32 = arith.constant 0 : i32
    %c0_i32_0 = arith.constant 0 : i32
    %c0_i32_1 = arith.constant 0 : i32
    return %arg0, %c0_i32, %c0_i32_0 : i32, i32, i32
  }
  func.func @transform_6(%arg0: i32, %arg1: i32) -> (i32, i32, i32) {
    %c0_i32 = arith.constant 0 : i32
    %c0_i32_0 = arith.constant 0 : i32
    %c0_i32_1 = arith.constant 0 : i32
    return %arg0, %c0_i32, %c0_i32_0 : i32, i32, i32
  }
}

module attributes {stable_mosaic.version = 11 : i64} {
  func.func @_normalize_kernel(%arg0: i32, %arg1: i32, %arg2: memref<1x32x8xf32, #tpu.memory_space<vmem>>, %arg3: memref<64x32xbf16, #tpu.memory_space<vmem>>, %arg4: memref<64x1xf32, #tpu.memory_space<vmem>>, %arg5: memref<32x64xbf16, #tpu.memory_space<vmem>>, %arg6: memref<32x1xf32, #tpu.memory_space<vmem>>, %arg7: memref<32x1xf32, #tpu.memory_space<vmem>>, %arg8: memref<32x1xf32, #tpu.memory_space<vmem>>, %arg9: memref<1x32x8xf32, #tpu.memory_space<vmem>>) attributes {dimension_semantics = [#tpu.dimension_semantics<parallel>, #tpu.dimension_semantics<parallel>], iteration_bounds = array<i64: 2, 1>, scalar_prefetch = 0 : i64, scratch_operands = 0 : i64, tpu.core_type = #tpu.core_type<tc>, window_params = [{transform_indices = @transform_0, window_bounds = array<i64: 1, 32, 8>}, {pipeline_mode = #tpu.pipeline_mode<synchronous>, transform_indices = @transform_1, window_bounds = array<i64: 64, 32>}, {pipeline_mode = #tpu.pipeline_mode<synchronous>, transform_indices = @transform_2, window_bounds = array<i64: 64, 1>}, {pipeline_mode = #tpu.pipeline_mode<synchronous>, transform_indices = @transform_3, window_bounds = array<i64: 32, 64>}, {pipeline_mode = #tpu.pipeline_mode<synchronous>, transform_indices = @transform_4, window_bounds = array<i64: 32, 1>}, {pipeline_mode = #tpu.pipeline_mode<synchronous>, transform_indices = @transform_5, window_bounds = array<i64: 32, 1>}, {pipeline_mode = #tpu.pipeline_mode<synchronous>, transform_indices = @transform_6, window_bounds = array<i64: 32, 1>}, {transform_indices = @transform_7, window_bounds = array<i64: 1, 32, 8>}]} {
    %c0 = arith.constant 0 : index
    %c0_0 = arith.constant 0 : index
    %c0_1 = arith.constant 0 : index
    %0 = vector.load %arg2[%c0, %c0_0, %c0_1] : memref<1x32x8xf32, #tpu.memory_space<vmem>>, vector<1x32x8xf32>
    %1 = vector.shape_cast %0 : vector<1x32x8xf32> to vector<32x8xf32>
    %c0_2 = arith.constant 0 : index
    %c0_3 = arith.constant 0 : index
    %2 = vector.load %arg3[%c0_2, %c0_3] : memref<64x32xbf16, #tpu.memory_space<vmem>>, vector<64x32xbf16>
    %3 = arith.truncf %1 : vector<32x8xf32> to vector<32x8xbf16>
    %cst = arith.constant dense<0.000000e+00> : vector<64x8xf32>
    %4 = tpu.matmul %2, %3, %cst {dimension_numbers = #tpu.dot_dimension_numbers<[1], [0], [0], [1], [0, 0, 1, 1], [], []>} : vector<64x32xbf16>, vector<32x8xbf16>, vector<64x8xf32> -> vector<64x8xf32>
    %c0_4 = arith.constant 0 : index
    %c0_5 = arith.constant 0 : index
    %5 = vector.load %arg4[%c0_4, %c0_5] : memref<64x1xf32, #tpu.memory_space<vmem>>, vector<64x1xf32>
    %6 = vector.broadcast %5 : vector<64x1xf32> to vector<64x8xf32>
    %7 = arith.addf %4, %6 : vector<64x8xf32>
    %cst_6 = arith.constant 0.000000e+00 : f32
    %8 = vector.broadcast %cst_6 : f32 to vector<64x8xf32>
    %9 = arith.maximumf %7, %8 : vector<64x8xf32>
    %c0_7 = arith.constant 0 : index
    %c0_8 = arith.constant 0 : index
    %10 = vector.load %arg5[%c0_7, %c0_8] : memref<32x64xbf16, #tpu.memory_space<vmem>>, vector<32x64xbf16>
    %11 = arith.truncf %9 : vector<64x8xf32> to vector<64x8xbf16>
    %cst_9 = arith.constant dense<0.000000e+00> : vector<32x8xf32>
    %12 = tpu.matmul %10, %11, %cst_9 {dimension_numbers = #tpu.dot_dimension_numbers<[1], [0], [0], [1], [0, 0, 1, 1], [], []>} : vector<32x64xbf16>, vector<64x8xbf16>, vector<32x8xf32> -> vector<32x8xf32>
    %c0_10 = arith.constant 0 : index
    %c0_11 = arith.constant 0 : index
    %13 = vector.load %arg6[%c0_10, %c0_11] : memref<32x1xf32, #tpu.memory_space<vmem>>, vector<32x1xf32>
    %14 = vector.broadcast %13 : vector<32x1xf32> to vector<32x8xf32>
    %15 = arith.addf %12, %14 : vector<32x8xf32>
    %16 = arith.addf %15, %1 : vector<32x8xf32>
    %c0_12 = arith.constant 0 : index
    %c0_13 = arith.constant 0 : index
    %17 = vector.load %arg7[%c0_12, %c0_13] : memref<32x1xf32, #tpu.memory_space<vmem>>, vector<32x1xf32>
    %18 = vector.broadcast %17 : vector<32x1xf32> to vector<32x8xf32>
    %19 = arith.mulf %16, %18 : vector<32x8xf32>
    %c0_14 = arith.constant 0 : index
    %c0_15 = arith.constant 0 : index
    %20 = vector.load %arg8[%c0_14, %c0_15] : memref<32x1xf32, #tpu.memory_space<vmem>>, vector<32x1xf32>
    %21 = vector.broadcast %20 : vector<32x1xf32> to vector<32x8xf32>
    %22 = arith.addf %19, %21 : vector<32x8xf32>
    %c0_16 = arith.constant 0 : index
    %c0_17 = arith.constant 0 : index
    %c0_18 = arith.constant 0 : index
    %23 = vector.load %arg9[%c0_16, %c0_17, %c0_18] : memref<1x32x8xf32, #tpu.memory_space<vmem>>, vector<1x32x8xf32>
    %24 = vector.shape_cast %23 : vector<1x32x8xf32> to vector<32x8xf32>
    %25 = vector.shape_cast %22 : vector<32x8xf32> to vector<1x32x8xf32>
    tpu.vector_store %arg9[%c0_16, %c0_17, %c0_18], %25 {strides = array<i32>} : memref<1x32x8xf32, #tpu.memory_space<vmem>>, vector<1x32x8xf32>,
    return
  }
  func.func @transform_0(%arg0: i32, %arg1: i32) -> (i32, i32, i32) {
    %c0_i32 = arith.constant 0 : i32
    %c0_i32_0 = arith.constant 0 : i32
    return %arg0, %c0_i32, %arg1 : i32, i32, i32
  }
  func.func @transform_1(%arg0: i32, %arg1: i32) -> (i32, i32) {
    %c0_i32 = arith.constant 0 : i32
    %c0_i32_0 = arith.constant 0 : i32
    %c0_i32_1 = arith.constant 0 : i32
    return %c0_i32, %c0_i32_0 : i32, i32
  }
  func.func @transform_2(%arg0: i32, %arg1: i32) -> (i32, i32) {
    %c0_i32 = arith.constant 0 : i32
    %c0_i32_0 = arith.constant 0 : i32
    %c0_i32_1 = arith.constant 0 : i32
    return %c0_i32, %c0_i32_0 : i32, i32
  }
  func.func @transform_3(%arg0: i32, %arg1: i32) -> (i32, i32) {
    %c0_i32 = arith.constant 0 : i32
    %c0_i32_0 = arith.constant 0 : i32
    %c0_i32_1 = arith.constant 0 : i32
    return %c0_i32, %c0_i32_0 : i32, i32
  }
  func.func @transform_4(%arg0: i32, %arg1: i32) -> (i32, i32) {
    %c0_i32 = arith.constant 0 : i32
    %c0_i32_0 = arith.constant 0 : i32
    %c0_i32_1 = arith.constant 0 : i32
    return %c0_i32, %c0_i32_0 : i32, i32
  }
  func.func @transform_5(%arg0: i32, %arg1: i32) -> (i32, i32) {
    %c0_i32 = arith.constant 0 : i32
    %c0_i32_0 = arith.constant 0 : i32
    %c0_i32_1 = arith.constant 0 : i32
    return %c0_i32, %c0_i32_0 : i32, i32
  }
  func.func @transform_6(%arg0: i32, %arg1: i32) -> (i32, i32) {
    %c0_i32 = arith.constant 0 : i32
    %c0_i32_0 = arith.constant 0 : i32
    %c0_i32_1 = arith.constant 0 : i32
    return %c0_i32, %c0_i32_0 : i32, i32
  }
  func.func @transform_7(%arg0: i32, %arg1: i32) -> (i32, i32, i32) {
    %c0_i32 = arith.constant 0 : i32
    %c0_i32_0 = arith.constant 0 : i32
    return %arg0, %c0_i32, %arg1 : i32, i32, i32
  }
}

</mosaic_0001>

<llo_original>
// kernel: feed_forward.2
$region0: #{feed_forward.2}
  #allocation0 [shape = 'u32[]', space=smem, size = 0x4, offset = 0x4, fixed_abs, tag = 'smem constant byte address 0x4 - core index']
  #allocation1 [shape = 'u32[144,128]{1,0:T(1,128)}', space=vmem, size = 0x12000, scoped, tag = 'internal scratch']
  %s0 = inlined_call_operand.vmem [shape: f32[2,32,8], index: 0, kind: input, shape index: {}]
  %s1 = inlined_call_operand.vmem [shape: bf16[64,32], index: 1, kind: input, shape index: {}]
  %s2 = inlined_call_operand.vmem [shape: f32[64,1], index: 2, kind: input, shape index: {}]
  %s3 = inlined_call_operand.vmem [shape: bf16[32,64], index: 3, kind: input, shape index: {}]
  %s4 = inlined_call_operand.vmem [shape: f32[32,1], index: 4, kind: input, shape index: {}]
  %s5 = inlined_call_operand.vmem [shape: f32[2,32,1], index: 5, kind: output, shape index: {0}]
  %s6 = inlined_call_operand.vmem [shape: f32[2,32,1], index: 6, kind: output, shape index: {1}]
  %7 = xla_tuple %s5, %s6
  %s8 = sld [smem:[#allocation0]]
  $region65: #{feed_forward.2} parent=0
    _
  %s10 = ssub.s32 1, %s8
  %s11 = scalar_select 0, %s10, %s8
  loop: start=0, step=1, limit=4
  $region2: #{feed_forward.2} parent=0 // loop_pre_header
    _
  $region3: #{feed_forward.2} parent=0 // loop_header
    %s13 = sphi 0, %s17
    %p14 = scmp.ge.s32.totalorder %s13, 4
    %s20 = sphi 0, %s32
    %s21 = sphi 0, %s28
    %s22 = sphi 0, %s20
    %s23 = sphi 0, %s21
    %s24 = sphi 0, %s22
    %s25 = sphi 0, %s23
    %s37 = sphi 0, %s39
    %s40 = sphi 0, %s37
    %s41 = sphi 0, %s40
    %s57 = sphi 0, %s41
    %s61 = sphi 0, %s61
    %s63 = sphi 0, %s61
    %s64 = sphi 0, %s63
    %s78 = sphi 0, %s64
    %s82 = sphi 0, %s82
    %s84 = sphi 0, %s82
    %s85 = sphi 0, %s84
    %s99 = sphi 0, %s85
    %s103 = sphi 0, %s103
    %s105 = sphi 0, %s103
    %s106 = sphi 0, %s105
    %s120 = sphi 0, %s106
    %s124 = sphi 0, %s124
    %s126 = sphi 0, %s124
    %s127 = sphi 0, %s126
    %s141 = sphi 0, %s127
    %s147 = sphi 0, %s149
    %s150 = sphi 0, %s147
    %s151 = sphi 0, %s150
    %s167 = sphi 0, %s151
    %s173 = sphi 0, %s175
    %s176 = sphi 0, %s173
    %s177 = sphi 0, %s176
    %s193 = sphi 0, %s177
  $region4: #{feed_forward.2} parent=0 // loop_header_branch
    %16 = sbr.rel (%p14) target = $region8
  $region5: #{feed_forward.2} parent=0 // loop_body
    %s18 = ssub.s32 %s13, 1
    %s19 = ssub.s32 %s13, 2
    %s26 = sadd.s32 1, %s21
    %p27 = scmp.ge.s32.totalorder %s26, 1
    %s28 = scalar_select %p27, 0, %s26
    %s29 = sadd.s32 1, %s20
    %s30 = scalar_select %p27, %s29, %s20
    %p31 = scmp.ge.s32.totalorder %s30, 2
    %s32 = scalar_select %p31, 0, %s30
    %s33 = ssub.s32 %s20, %s32
    %s34 = ssub.s32 %s21, %s28
    %s35 = sor.u32 %s33, %s34
    %p36 = scmp.eq.s32.totalorder %s35, 0
    %s38 = sadd.s32 %s37, 1
    %s39 = scalar_select %p36, %s37, %s38
    %p42 = pneg %p36
    %p43 = scmp.eq.s32.totalorder %s13, 1
    %p44 = por %p42, %p43
    %p45 = scmp.ne.s32.totalorder %s37, %s40
    %p46 = scmp.eq.s32.totalorder %s13, 0
    %p47 = por %p45, %p46
    %p48 = scmp.ne.s32.totalorder %s37, %s40
    %p49 = scmp.eq.s32.totalorder %s18, 1
    %p50 = por %p48, %p49
    %p51 = scmp.ne.s32.totalorder %s40, %s41
    %p52 = scmp.eq.s32.totalorder %s18, 0
    %p53 = por %p51, %p52
    %p54 = scmp.ne.s32.totalorder %s40, %s41
    %p55 = scmp.eq.s32.totalorder %s19, 1
    %p56 = por %p54, %p55
    %p58 = scmp.ne.s32.totalorder %s41, %s57
    %p59 = scmp.eq.s32.totalorder %s19, 0
    %p60 = por %p58, %p59
    %s62 = sadd.s32 %s61, 1
    %p65 = scmp.eq.s32.totalorder %s13, 1
    %p66 = scmp.ne.s32.totalorder %s61, %s63
    %p67 = scmp.eq.s32.totalorder %s13, 0
    %p68 = por %p66, %p67
    %p69 = scmp.ne.s32.totalorder %s61, %s63
    %p70 = scmp.eq.s32.totalorder %s18, 1
    %p71 = por %p69, %p70
    %p72 = scmp.ne.s32.totalorder %s63, %s64
    %p73 = scmp.eq.s32.totalorder %s18, 0
    %p74 = por %p72, %p73
    %p75 = scmp.ne.s32.totalorder %s63, %s64
    %p76 = scmp.eq.s32.totalorder %s19, 1
    %p77 = por %p75, %p76
    %p79 = scmp.ne.s32.totalorder %s64, %s78
    %p80 = scmp.eq.s32.totalorder %s19, 0
    %p81 = por %p79, %p80
    %s83 = sadd.s32 %s82, 1
    %p86 = scmp.eq.s32.totalorder %s13, 1
    %p87 = scmp.ne.s32.totalorder %s82, %s84
    %p88 = scmp.eq.s32.totalorder %s13, 0
    %p89 = por %p87, %p88
    %p90 = scmp.ne.s32.totalorder %s82, %s84
    %p91 = scmp.eq.s32.totalorder %s18, 1
    %p92 = por %p90, %p91
    %p93 = scmp.ne.s32.totalorder %s84, %s85
    %p94 = scmp.eq.s32.totalorder %s18, 0
    %p95 = por %p93, %p94
    %p96 = scmp.ne.s32.totalorder %s84, %s85
    %p97 = scmp.eq.s32.totalorder %s19, 1
    %p98 = por %p96, %p97
    %p100 = scmp.ne.s32.totalorder %s85, %s99
    %p101 = scmp.eq.s32.totalorder %s19, 0
    %p102 = por %p100, %p101
    %s104 = sadd.s32 %s103, 1
    %p107 = scmp.eq.s32.totalorder %s13, 1
    %p108 = scmp.ne.s32.totalorder %s103, %s105
    %p109 = scmp.eq.s32.totalorder %s13, 0
    %p110 = por %p108, %p109
    %p111 = scmp.ne.s32.totalorder %s103, %s105
    %p112 = scmp.eq.s32.totalorder %s18, 1
    %p113 = por %p111, %p112
    %p114 = scmp.ne.s32.totalorder %s105, %s106
    %p115 = scmp.eq.s32.totalorder %s18, 0
    %p116 = por %p114, %p115
    %p117 = scmp.ne.s32.totalorder %s105, %s106
    %p118 = scmp.eq.s32.totalorder %s19, 1
    %p119 = por %p117, %p118
    %p121 = scmp.ne.s32.totalorder %s106, %s120
    %p122 = scmp.eq.s32.totalorder %s19, 0
    %p123 = por %p121, %p122
    %s125 = sadd.s32 %s124, 1
    %p128 = scmp.eq.s32.totalorder %s13, 1
    %p129 = scmp.ne.s32.totalorder %s124, %s126
    %p130 = scmp.eq.s32.totalorder %s13, 0
    %p131 = por %p129, %p130
    %p132 = scmp.ne.s32.totalorder %s124, %s126
    %p133 = scmp.eq.s32.totalorder %s18, 1
    %p134 = por %p132, %p133
    %p135 = scmp.ne.s32.totalorder %s126, %s127
    %p136 = scmp.eq.s32.totalorder %s18, 0
    %p137 = por %p135, %p136
    %p138 = scmp.ne.s32.totalorder %s126, %s127
    %p139 = scmp.eq.s32.totalorder %s19, 1
    %p140 = por %p138, %p139
    %p142 = scmp.ne.s32.totalorder %s127, %s141
    %p143 = scmp.eq.s32.totalorder %s19, 0
    %p144 = por %p142, %p143
    %s145 = ssub.s32 %s20, %s32
    %p146 = scmp.eq.s32.totalorder %s145, 0
    %s148 = sadd.s32 %s147, 1
    %s149 = scalar_select %p146, %s147, %s148
    %p152 = pneg %p146
    %p153 = scmp.eq.s32.totalorder %s13, 1
    %p154 = por %p152, %p153
    %p155 = scmp.ne.s32.totalorder %s147, %s150
    %p156 = scmp.eq.s32.totalorder %s13, 0
    %p157 = por %p155, %p156
    %p158 = scmp.ne.s32.totalorder %s147, %s150
    %p159 = scmp.eq.s32.totalorder %s18, 1
    %p160 = por %p158, %p159
    %p161 = scmp.ne.s32.totalorder %s150, %s151
    %p162 = scmp.eq.s32.totalorder %s18, 0
    %p163 = por %p161, %p162
    %p164 = scmp.ne.s32.totalorder %s150, %s151
    %p165 = scmp.eq.s32.totalorder %s19, 1
    %p166 = por %p164, %p165
    %p168 = scmp.ne.s32.totalorder %s151, %s167
    %p169 = scmp.eq.s32.totalorder %s19, 0
    %p170 = por %p168, %p169
    %s171 = ssub.s32 %s20, %s32
    %p172 = scmp.eq.s32.totalorder %s171, 0
    %s174 = sadd.s32 %s173, 1
    %s175 = scalar_select %p172, %s173, %s174
    %p178 = pneg %p172
    %p179 = scmp.eq.s32.totalorder %s13, 1
    %p180 = por %p178, %p179
    %p181 = scmp.ne.s32.totalorder %s173, %s176
    %p182 = scmp.eq.s32.totalorder %s13, 0
    %p183 = por %p181, %p182
    %p184 = scmp.ne.s32.totalorder %s173, %s176
    %p185 = scmp.eq.s32.totalorder %s18, 1
    %p186 = por %p184, %p185
    %p187 = scmp.ne.s32.totalorder %s176, %s177
    %p188 = scmp.eq.s32.totalorder %s18, 0
    %p189 = por %p187, %p188
    %p190 = scmp.ne.s32.totalorder %s176, %s177
    %p191 = scmp.eq.s32.totalorder %s19, 1
    %p192 = por %p190, %p191
    %p194 = scmp.ne.s32.totalorder %s177, %s193
    %p195 = scmp.eq.s32.totalorder %s19, 0
    %p196 = por %p194, %p195
    %p197 = scmp.le.s32.totalorder 1, %s13
    %p198 = scmp.lt.s32.totalorder %s13, 3
    %p199 = pnand %p197, %p198
    %p200 = pneg %p199
    // Predicated region
    $region9: #{feed_forward.2} parent=5 // pred_check
      _
    $region10: #{feed_forward.2} parent=5 // pred_check_branch
      %202 = sbr.rel (%p199) target = $region12
    $region11: #{feed_forward.2} parent=5 // pred_region
      %s203 = ssub.s32 %s13, 1
      // Predicated region
      $region13: #{feed_forward.2} parent=11 // pred_check
        %p204 = pneg %p74
      $region14: #{feed_forward.2} parent=11 // pred_check_branch
        %206 = sbr.rel (%p204) target = $region16
      $region15: #{feed_forward.2} parent=11 // pred_region
        _
      $region16: #{feed_forward.2} parent=11 // pred_fallthru
        _
      // Predicated region
      $region17: #{feed_forward.2} parent=11 // pred_check
        %p207 = pneg %p95
      $region18: #{feed_forward.2} parent=11 // pred_check_branch
        %209 = sbr.rel (%p207) target = $region20
      $region19: #{feed_forward.2} parent=11 // pred_region
        _
      $region20: #{feed_forward.2} parent=11 // pred_fallthru
        _
      // Predicated region
      $region21: #{feed_forward.2} parent=11 // pred_check
        %p210 = pneg %p116
      $region22: #{feed_forward.2} parent=11 // pred_check_branch
        %212 = sbr.rel (%p210) target = $region24
      $region23: #{feed_forward.2} parent=11 // pred_region
        _
      $region24: #{feed_forward.2} parent=11 // pred_fallthru
        _
      // Predicated region
      $region25: #{feed_forward.2} parent=11 // pred_check
        %p213 = pneg %p137
      $region26: #{feed_forward.2} parent=11 // pred_check_branch
        %215 = sbr.rel (%p213) target = $region28
      $region27: #{feed_forward.2} parent=11 // pred_region
        _
      $region28: #{feed_forward.2} parent=11 // pred_fallthru
        _
    $region12: #{feed_forward.2} parent=5 // pred_fallthru
      _
    %p216 = scmp.lt.s32.totalorder %s13, 2
    // Predicated region
    $region29: #{feed_forward.2} parent=5 // pred_check
      %p217 = pneg %p216
    $region30: #{feed_forward.2} parent=5 // pred_check_branch
      %219 = sbr.rel (%p217) target = $region32
    $region31: #{feed_forward.2} parent=5 // pred_region
      // Predicated region
      $region33: #{feed_forward.2} parent=31 // pred_check
        %p220 = pneg %p47
      $region34: #{feed_forward.2} parent=31 // pred_check_branch
        %222 = sbr.rel (%p220) target = $region36
      $region35: #{feed_forward.2} parent=31 // pred_region
        %p223 = scmp.lt.s32.totalorder %s20, 1
        %s224 = scalar_select %p223, %s20, 1
        %p225 = scmp.lt.s32.totalorder %s21, 0
        %s226 = scalar_select %p225, %s21, 0
        %s227 = smul.addr %s224, 4
        %s228 = sadd.s32 %s226, %s227
        %s229 = smul.addr %s228, 8
        %s230 = scalar_lea.vmem %s0, %s229
      $region36: #{feed_forward.2} parent=31 // pred_fallthru
        _
    $region32: #{feed_forward.2} parent=5 // pred_fallthru
      _
    %p231 = scmp.le.s32.totalorder 1, %s13
    %p232 = scmp.lt.s32.totalorder %s13, 3
    %p233 = pnand %p231, %p232
    %p234 = pneg %p233
    // Predicated region
    $region37: #{feed_forward.2} parent=5 // pred_check
      _
    $region38: #{feed_forward.2} parent=5 // pred_check_branch
      %236 = sbr.rel (%p233) target = $region40
    $region39: #{feed_forward.2} parent=5 // pred_region
      %s237 = ssub.s32 %s13, 1
      %p238 = scmp.lt.s32.totalorder %s22, 1
      %s239 = scalar_select %p238, %s22, 1
      %p240 = scmp.lt.s32.totalorder %s23, 0
      %s241 = scalar_select %p240, %s23, 0
      %s242 = smul.addr %s239, 4
      %s243 = sadd.s32 %s241, %s242
      %s244 = smul.addr %s243, 8
      %s245 = scalar_lea.vmem %s0, %s244
      %p246 = pneg %p53
      %p247 = pneg %p50
      %p248 = pneg %p74
      %p249 = pneg %p71
      %p250 = pneg %p95
      %p251 = pneg %p92
      %p252 = pneg %p116
      %p253 = pneg %p113
      %p254 = pneg %p137
      %p255 = pneg %p134
      %p256 = pneg %p163
      %p257 = pneg %p160
      %p258 = scmp.lt.s32.totalorder %s22, 1
      %s259 = scalar_select %p258, %s22, 1
      %s260 = smul.addr %s259, 4
      %s261 = smul.addr %s260, 8
      %s262 = scalar_lea.vmem %s5, %s261
      %p263 = pneg %p189
      %p264 = pneg %p186
      %p265 = scmp.lt.s32.totalorder %s22, 1
      %s266 = scalar_select %p265, %s22, 1
      %s267 = smul.addr %s266, 4
      %s268 = smul.addr %s267, 8
      %s269 = scalar_lea.vmem %s6, %s268
      %p270 = scmp.lt.s32.totalorder %s22, 1
      %s271 = scalar_select %p270, %s22, 1
      %p272 = scmp.lt.s32.totalorder %s23, 0
      %s273 = scalar_select %p272, %s23, 0
      %s274 = smul.addr %s271, 4
      %s275 = sadd.s32 %s273, %s274
      %s276 = smul.addr %s275, 8
      %s277 = scalar_lea.vmem %s0, %s276
      %p278 = scmp.lt.s32.totalorder %s22, 1
      %s279 = scalar_select %p278, %s22, 1
      %s280 = smul.addr %s279, 4
      %s281 = smul.addr %s280, 8
      %s282 = scalar_lea.vmem %s5, %s281
      %p283 = scmp.lt.s32.totalorder %s22, 1
      %s284 = scalar_select %p283, %s22, 1
      %s285 = smul.addr %s284, 4
      %s286 = smul.addr %s285, 8
      %s287 = scalar_lea.vmem %s6, %s286
      %p289 = scmp.eq.s32.totalorder %s23, 0
      // Predicated region
      $region41: #{feed_forward.2} parent=39 // pred_check
        %p290 = pneg %p289
      $region42: #{feed_forward.2} parent=39 // pred_check_branch
        %292 = sbr.rel (%p290) target = $region44
      $region43: #{feed_forward.2} parent=39 // pred_region
        %vm293 = vcmask 7168
        %294 = vst.msk [vmem:[%s282] sm:$0xff] %vm293, 0.0
        %295 = vst.msk [vmem:[%s282 + $0x8] sm:$0xff] %vm293, 0.0
        %296 = vst.msk [vmem:[%s282 + $0x10] sm:$0xff] %vm293, 0.0
        %297 = vst.msk [vmem:[%s282 + $0x18] sm:$0xff] %vm293, 0.0
        %298 = vst.msk [vmem:[%s287] sm:$0xff] %vm293, 0.0
        %299 = vst.msk [vmem:[%s287 + $0x8] sm:$0xff] %vm293, 0.0
        %300 = vst.msk [vmem:[%s287 + $0x10] sm:$0xff] %vm293, 0.0
        %301 = vst.msk [vmem:[%s287 + $0x18] sm:$0xff] %vm293, 0.0
      $region44: #{feed_forward.2} parent=39 // pred_fallthru
        _
      %v302 = vld [vmem:[%s277] sm:$0xff]
      %v303 = vld [vmem:[%s277 + $0x8] sm:$0xff]
      %v304 = vld [vmem:[%s277 + $0x10] sm:$0xff]
      %v305 = vld [vmem:[%s277 + $0x18] sm:$0xff]
      %v306 = vld [vmem:[%s1] sm:$0xf]
      %v307 = vld [vmem:[%s1 + $0x4] sm:$0xf]
      %v308 = vld [vmem:[%s1 + $0x8] sm:$0xf]
      %v309 = vld [vmem:[%s1 + $0xc] sm:$0xf]
      %v310 = vld [vmem:[%s1 + $0x10] sm:$0xf]
      %v311 = vld [vmem:[%s1 + $0x14] sm:$0xf]
      %v312 = vld [vmem:[%s1 + $0x18] sm:$0xf]
      %v313 = vld [vmem:[%s1 + $0x1c] sm:$0xf]
      %v314 = vpack.c.bf16 %v303, %v302
      %v315 = vpack.c.bf16 %v305, %v304
      %v316 = vld [vmem:[%s2] sm:$0xff]
      %v317 = vld [vmem:[%s2 + $0x8] sm:$0xff]
      %v318 = vld [vmem:[%s2 + $0x10] sm:$0xff]
      %v319 = vld [vmem:[%s2 + $0x18] sm:$0xff]
      %v320 = vld [vmem:[%s2 + $0x20] sm:$0xff]
      %v321 = vld [vmem:[%s2 + $0x28] sm:$0xff]
      %v322 = vld [vmem:[%s2 + $0x30] sm:$0xff]
      %v323 = vld [vmem:[%s2 + $0x38] sm:$0xff]
      %325 = vset.pattern.permute.xlu0 0
      %326 = vperm.xlu0 %325, %v316
      %v327 = vpop.permute.xlu0 %326
      %330 = vset.pattern.permute.xlu0 0
      %331 = vperm.xlu0 %330, %v317
      %v332 = vpop.permute.xlu0 %331
      %335 = vset.pattern.permute.xlu0 0
      %336 = vperm.xlu0 %335, %v318
      %v337 = vpop.permute.xlu0 %336
      %340 = vset.pattern.permute.xlu0 0
      %341 = vperm.xlu0 %340, %v319
      %v342 = vpop.permute.xlu0 %341
      %345 = vset.pattern.permute.xlu0 0
      %346 = vperm.xlu0 %345, %v320
      %v347 = vpop.permute.xlu0 %346
      %350 = vset.pattern.permute.xlu0 0
      %351 = vperm.xlu0 %350, %v321
      %v352 = vpop.permute.xlu0 %351
      %355 = vset.pattern.permute.xlu0 0
      %356 = vperm.xlu0 %355, %v322
      %v357 = vpop.permute.xlu0 %356
      %360 = vset.pattern.permute.xlu0 0
      %361 = vperm.xlu0 %360, %v323
      %v362 = vpop.permute.xlu0 %361
      %v372 = vunpack.c.l.b16 %v306
      %v373 = vunpack.c.l.b16 %v307
      %v374 = vunpack.c.l.b16 %v308
      %v375 = vunpack.c.l.b16 %v309
      %v376 = vunpack.c.l.b16 %v310
      %v377 = vunpack.c.l.b16 %v311
      %v378 = vunpack.c.l.b16 %v312
      %v379 = vunpack.c.l.b16 %v313
      %v380 = vpack.c.b16 %v373, %v372
      %v381 = vpack.c.b16 %v375, %v374
      %v382 = vpack.c.b16 %v377, %v376
      %v383 = vpack.c.b16 %v379, %v378
      %vm384 = vcmask 261120
      %v386 = vsel %vm384, %v380, 0
      %v389 = vsel %vm384, %v381, 0
      %v392 = vsel %vm384, %v382, 0
      %v395 = vsel %vm384, %v383, 0
      %397 = vmatprep.subr.bf16.mxu0 0
      %398 = vmatpush1.bf16.msra.mxu0 %v314
      %399 = vmatprep.subr.bf16.mxu0 0
      %400 = vmatpush1.bf16.msra.mxu0 %v315
      %401 = vmatprep.subr.bf16.mxu0 0
      %402 = vmatpush1.bf16.msra.mxu0 0
      %403 = vmatprep.subr.bf16.mxu0 0
      %404 = vmatpush1.bf16.msra.mxu0 0
      %405 = vmatprep.subr.bf16.mxu0 0
      %406 = vmatpush1.bf16.msra.mxu0 0
      %407 = vmatprep.subr.bf16.mxu0 0
      %408 = vmatpush1.bf16.msra.mxu0 0
      %409 = vmatprep.subr.bf16.mxu0 0
      %410 = vmatpush1.bf16.msra.mxu0 0
      %411 = vmatprep.subr.bf16.mxu0 0
      %412 = vmatpush1.bf16.msra.mxu0 0
      %413 = vmatprep.subr.bf16.mxu0 0
      %414 = vmatpush1.bf16.msra.mxu0 0
      %415 = vmatprep.subr.bf16.mxu0 0
      %416 = vmatpush1.bf16.msra.mxu0 0
      %417 = vmatprep.subr.bf16.mxu0 0
      %418 = vmatpush1.bf16.msra.mxu0 0
      %419 = vmatprep.subr.bf16.mxu0 0
      %420 = vmatpush1.bf16.msra.mxu0 0
      %421 = vmatprep.subr.bf16.mxu0 0
      %422 = vmatpush1.bf16.msra.mxu0 0
      %423 = vmatprep.subr.bf16.mxu0 0
      %424 = vmatpush1.bf16.msra.mxu0 0
      %425 = vmatprep.subr.bf16.mxu0 0
      %426 = vmatpush1.bf16.msra.mxu0 0
      %427 = vmatprep.subr.bf16.mxu0 0
      %428 = vmatpush1.bf16.msra.mxu0 0
      %429 = vmatprep.mubr.bf16.mxu0 0
      %430 = vmatmul.mubr.bf16.gmra.mrb[0].mxu0 %v386
      %v431 = vpop.f32.mrb[0].mxu0
      %v432 = vadd.f32 %v327, %v431
      %v433 = vpop.f32.mrb[0].mxu0
      %v434 = vpop.f32.mrb[0].mxu0
      %v435 = vadd.f32 %v332, %v434
      %v436 = vpop.f32.mrb[0].mxu0
      %437 = vmatprep.mubr.bf16.mxu0 0
      %438 = vmatmul.mubr.bf16.gmra.mrb[0].mxu0 %v389
      %v439 = vpop.f32.mrb[0].mxu0
      %v440 = vadd.f32 %v337, %v439
      %v441 = vpop.f32.mrb[0].mxu0
      %v442 = vpop.f32.mrb[0].mxu0
      %v443 = vadd.f32 %v342, %v442
      %v444 = vpop.f32.mrb[0].mxu0
      %445 = vmatprep.mubr.bf16.mxu0 0
      %446 = vmatmul.mubr.bf16.gmra.mrb[0].mxu0 %v392
      %v447 = vpop.f32.mrb[0].mxu0
      %v448 = vadd.f32 %v347, %v447
      %v449 = vpop.f32.mrb[0].mxu0
      %v450 = vpop.f32.mrb[0].mxu0
      %v451 = vadd.f32 %v352, %v450
      %v452 = vpop.f32.mrb[0].mxu0
      %453 = vmatprep.mubr.bf16.mxu0 0
      %454 = vmatmul.mubr.bf16.gmra.mrb[0].mxu0 %v395
      %v455 = vpop.f32.mrb[0].mxu0
      %v456 = vadd.f32 %v357, %v455
      %v457 = vpop.f32.mrb[0].mxu0
      %v458 = vpop.f32.mrb[0].mxu0
      %v459 = vadd.f32 %v362, %v458
      %v460 = vpop.f32.mrb[0].mxu0
      %461 = vdwg.mxu0
      %v462 = vmax.f32 %v432, 0.0
      %v463 = vmax.f32 %v435, 0.0
      %v464 = vmax.f32 %v440, 0.0
      %v465 = vmax.f32 %v443, 0.0
      %v466 = vmax.f32 %v448, 0.0
      %v467 = vmax.f32 %v451, 0.0
      %v468 = vmax.f32 %v456, 0.0
      %v469 = vmax.f32 %v459, 0.0
      %v470 = vld [vmem:[%s3] sm:$0xf]
      %v471 = vld [vmem:[%s3 + $0x4] sm:$0xf]
      %v472 = vld [vmem:[%s3 + $0x8] sm:$0xf]
      %v473 = vld [vmem:[%s3 + $0xc] sm:$0xf]
      %v474 = vpack.c.bf16 %v463, %v462
      %v475 = vpack.c.bf16 %v465, %v464
      %v476 = vpack.c.bf16 %v467, %v466
      %v477 = vpack.c.bf16 %v469, %v468
      %v478 = vld [vmem:[%s4] sm:$0xff]
      %v479 = vld [vmem:[%s4 + $0x8] sm:$0xff]
      %v480 = vld [vmem:[%s4 + $0x10] sm:$0xff]
      %v481 = vld [vmem:[%s4 + $0x18] sm:$0xff]
      %483 = vset.pattern.permute.xlu0 0
      %484 = vperm.xlu0 %483, %v478
      %v485 = vpop.permute.xlu0 %484
      %488 = vset.pattern.permute.xlu0 0
      %489 = vperm.xlu0 %488, %v479
      %v490 = vpop.permute.xlu0 %489
      %493 = vset.pattern.permute.xlu0 0
      %494 = vperm.xlu0 %493, %v480
      %v495 = vpop.permute.xlu0 %494
      %498 = vset.pattern.permute.xlu0 0
      %499 = vperm.xlu0 %498, %v481
      %v500 = vpop.permute.xlu0 %499
      %v506 = vunpack.c.l.b16 %v470
      %v507 = vunpack.c.l.b16 %v471
      %v508 = vunpack.c.l.b16 %v472
      %v509 = vunpack.c.l.b16 %v473
      %v510 = vpack.c.b16 %v507, %v506
      %v511 = vpack.c.b16 %v509, %v508
      %vm512 = vcmask 523264
      %v514 = vsel %vm512, %v510, 0
      %v517 = vsel %vm512, %v511, 0
      %519 = vmatprep.subr.bf16.mxu0 0
      %520 = vmatpush1.bf16.msra.mxu0 %v474
      %521 = vmatprep.subr.bf16.mxu0 0
      %522 = vmatpush1.bf16.msra.mxu0 %v475
      %523 = vmatprep.subr.bf16.mxu0 0
      %524 = vmatpush1.bf16.msra.mxu0 %v476
      %525 = vmatprep.subr.bf16.mxu0 0
      %526 = vmatpush1.bf16.msra.mxu0 %v477
      %527 = vmatprep.subr.bf16.mxu0 0
      %528 = vmatpush1.bf16.msra.mxu0 0
      %529 = vmatprep.subr.bf16.mxu0 0
      %530 = vmatpush1.bf16.msra.mxu0 0
      %531 = vmatprep.subr.bf16.mxu0 0
      %532 = vmatpush1.bf16.msra.mxu0 0
      %533 = vmatprep.subr.bf16.mxu0 0
      %534 = vmatpush1.bf16.msra.mxu0 0
      %535 = vmatprep.subr.bf16.mxu0 0
      %536 = vmatpush1.bf16.msra.mxu0 0
      %537 = vmatprep.subr.bf16.mxu0 0
      %538 = vmatpush1.bf16.msra.mxu0 0
      %539 = vmatprep.subr.bf16.mxu0 0
      %540 = vmatpush1.bf16.msra.mxu0 0
      %541 = vmatprep.subr.bf16.mxu0 0
      %542 = vmatpush1.bf16.msra.mxu0 0
      %543 = vmatprep.subr.bf16.mxu0 0
      %544 = vmatpush1.bf16.msra.mxu0 0
      %545 = vmatprep.subr.bf16.mxu0 0
      %546 = vmatpush1.bf16.msra.mxu0 0
      %547 = vmatprep.subr.bf16.mxu0 0
      %548 = vmatpush1.bf16.msra.mxu0 0
      %549 = vmatprep.subr.bf16.mxu0 0
      %550 = vmatpush1.bf16.msra.mxu0 0
      %551 = vmatprep.mubr.bf16.mxu0 0
      %552 = vmatmul.mubr.bf16.gmra.mrb[0].mxu0 %v514
      %v553 = vpop.f32.mrb[0].mxu0
      %v554 = vadd.f32 %v485, %v553
      %v555 = vpop.f32.mrb[0].mxu0
      %v556 = vpop.f32.mrb[0].mxu0
      %v557 = vadd.f32 %v490, %v556
      %v558 = vpop.f32.mrb[0].mxu0
      %559 = vmatprep.mubr.bf16.mxu0 0
      %560 = vmatmul.mubr.bf16.gmra.mrb[0].mxu0 %v517
      %v561 = vpop.f32.mrb[0].mxu0
      %v562 = vadd.f32 %v495, %v561
      %v563 = vpop.f32.mrb[0].mxu0
      %v564 = vpop.f32.mrb[0].mxu0
      %v565 = vadd.f32 %v500, %v564
      %v566 = vpop.f32.mrb[0].mxu0
      %567 = vdwg.mxu0
      %v568 = vadd.f32 %v554, %v302
      %v569 = vadd.f32 %v557, %v303
      %v570 = vadd.f32 %v562, %v304
      %v571 = vadd.f32 %v565, %v305
      %v572 = vld [vmem:[%s282] sm:$0xff]
      %v573 = vld [vmem:[%s282 + $0x8] sm:$0xff]
      %v574 = vld [vmem:[%s282 + $0x10] sm:$0xff]
      %v575 = vld [vmem:[%s282 + $0x18] sm:$0xff]
      %vm576 = vcmask 64512
      %v577 = vsel %vm576, %v568, 0.0
      %578 = vadd.xlane.f32.xlu0 %v577
      %v579 = vpop.xlane.xlu0 %578
      %v580 = vsel %vm576, %v569, 0.0
      %581 = vadd.xlane.f32.xlu0 %v580
      %v582 = vpop.xlane.xlu0 %581
      %v583 = vsel %vm576, %v570, 0.0
      %584 = vadd.xlane.f32.xlu0 %v583
      %v585 = vpop.xlane.xlu0 %584
      %v586 = vsel %vm576, %v571, 0.0
      %587 = vadd.xlane.f32.xlu0 %v586
      %v588 = vpop.xlane.xlu0 %587
      %v589 = vadd.f32 %v572, %v579
      %v590 = vadd.f32 %v573, %v582
      %v591 = vadd.f32 %v574, %v585
      %v592 = vadd.f32 %v575, %v588
      %vm593 = vcmask 7168
      %594 = vst.msk [vmem:[%s282] sm:$0xff] %vm593, %v589
      %595 = vst.msk [vmem:[%s282 + $0x8] sm:$0xff] %vm593, %v590
      %596 = vst.msk [vmem:[%s282 + $0x10] sm:$0xff] %vm593, %v591
      %597 = vst.msk [vmem:[%s282 + $0x18] sm:$0xff] %vm593, %v592
      %v598 = vld [vmem:[%s287] sm:$0xff]
      %v599 = vld [vmem:[%s287 + $0x8] sm:$0xff]
      %v600 = vld [vmem:[%s287 + $0x10] sm:$0xff]
      %v601 = vld [vmem:[%s287 + $0x18] sm:$0xff]
      %v602 = vmul.f32 %v568, %v568
      %v603 = vmul.f32 %v569, %v569
      %v604 = vmul.f32 %v570, %v570
      %v605 = vmul.f32 %v571, %v571
      %v606 = vsel %vm576, %v602, 0.0
      %607 = vadd.xlane.f32.xlu0 %v606
      %v608 = vpop.xlane.xlu0 %607
      %v609 = vsel %vm576, %v603, 0.0
      %610 = vadd.xlane.f32.xlu0 %v609
      %v611 = vpop.xlane.xlu0 %610
      %v612 = vsel %vm576, %v604, 0.0
      %613 = vadd.xlane.f32.xlu0 %v612
      %v614 = vpop.xlane.xlu0 %613
      %v615 = vsel %vm576, %v605, 0.0
      %616 = vadd.xlane.f32.xlu0 %v615
      %v617 = vpop.xlane.xlu0 %616
      %v618 = vadd.f32 %v598, %v608
      %v619 = vadd.f32 %v599, %v611
      %v620 = vadd.f32 %v600, %v614
      %v621 = vadd.f32 %v601, %v617
      %622 = vst.msk [vmem:[%s287] sm:$0xff] %vm593, %v618
      %623 = vst.msk [vmem:[%s287 + $0x8] sm:$0xff] %vm593, %v619
      %624 = vst.msk [vmem:[%s287 + $0x10] sm:$0xff] %vm593, %v620
      %625 = vst.msk [vmem:[%s287 + $0x18] sm:$0xff] %vm593, %v621
      %p626 = scmp.lt.s32.totalorder %s22, 1
      %s627 = scalar_select %p626, %s22, 1
      %s628 = smul.addr %s627, 4
      %s629 = smul.addr %s628, 8
      %s630 = scalar_lea.vmem %s5, %s629
      %p631 = scmp.lt.s32.totalorder %s22, 1
      %s632 = scalar_select %p631, %s22, 1
      %s633 = smul.addr %s632, 4
      %s634 = smul.addr %s633, 8
      %s635 = scalar_lea.vmem %s6, %s634
      // Predicated region
      $region45: #{feed_forward.2} parent=39 // pred_check
        %p636 = pneg %p160
      $region46: #{feed_forward.2} parent=39 // pred_check_branch
        %638 = sbr.rel (%p636) target = $region48
      $region47: #{feed_forward.2} parent=39 // pred_region
        _
      $region48: #{feed_forward.2} parent=39 // pred_fallthru
        _
      // Predicated region
      $region49: #{feed_forward.2} parent=39 // pred_check
        %p639 = pneg %p186
      $region50: #{feed_forward.2} parent=39 // pred_check_branch
        %641 = sbr.rel (%p639) target = $region52
      $region51: #{feed_forward.2} parent=39 // pred_region
        _
      $region52: #{feed_forward.2} parent=39 // pred_fallthru
        _
    $region40: #{feed_forward.2} parent=5 // pred_fallthru
      _
    %p642 = scmp.le.s32.totalorder 2, %s13
    // Predicated region
    $region53: #{feed_forward.2} parent=5 // pred_check
      %p643 = pneg %p642
    $region54: #{feed_forward.2} parent=5 // pred_check_branch
      %645 = sbr.rel (%p643) target = $region56
    $region55: #{feed_forward.2} parent=5 // pred_region
      %s646 = ssub.s32 %s13, 2
      // Predicated region
      $region57: #{feed_forward.2} parent=55 // pred_check
        %p647 = pneg %p166
      $region58: #{feed_forward.2} parent=55 // pred_check_branch
        %649 = sbr.rel (%p647) target = $region60
      $region59: #{feed_forward.2} parent=55 // pred_region
        %p650 = scmp.lt.s32.totalorder %s24, 1
        %s651 = scalar_select %p650, %s24, 1
        %s652 = smul.addr %s651, 4
        %s653 = smul.addr %s652, 8
        %s654 = scalar_lea.vmem %s5, %s653
      $region60: #{feed_forward.2} parent=55 // pred_fallthru
        _
      // Predicated region
      $region61: #{feed_forward.2} parent=55 // pred_check
        %p655 = pneg %p192
      $region62: #{feed_forward.2} parent=55 // pred_check_branch
        %657 = sbr.rel (%p655) target = $region64
      $region63: #{feed_forward.2} parent=55 // pred_region
        %p658 = scmp.lt.s32.totalorder %s24, 1
        %s659 = scalar_select %p658, %s24, 1
        %s660 = smul.addr %s659, 4
        %s661 = smul.addr %s660, 8
        %s662 = scalar_lea.vmem %s6, %s661
      $region64: #{feed_forward.2} parent=55 // pred_fallthru
        _
    $region56: #{feed_forward.2} parent=5 // pred_fallthru
      _
  $region6: #{feed_forward.2} parent=0 // loop_footer
    %s17 = sadd.s32 1, %s13
  $region7: #{feed_forward.2} parent=0 // loop_footer_branch
    %12 = sbr.rel target = $region3
  $region8: #{feed_forward.2} parent=0 // loop_exit
    _

// kernel: feed_forward.3
$region0: #{feed_forward.3}
  #allocation0 [shape = 'u32[]', space=smem, size = 0x4, offset = 0x4, fixed_abs, tag = 'smem constant byte address 0x4 - core index']
  #allocation1 [shape = 'u32[144,128]{1,0:T(1,128)}', space=vmem, size = 0x12000, scoped, tag = 'internal scratch']
  %s0 = inlined_call_operand.vmem [shape: f32[2,32,8], index: 0, kind: input, shape index: {}]
  %s1 = inlined_call_operand.vmem [shape: bf16[64,32], index: 1, kind: input, shape index: {}]
  %s2 = inlined_call_operand.vmem [shape: f32[64,1], index: 2, kind: input, shape index: {}]
  %s3 = inlined_call_operand.vmem [shape: bf16[32,64], index: 3, kind: input, shape index: {}]
  %s4 = inlined_call_operand.vmem [shape: f32[32,1], index: 4, kind: input, shape index: {}]
  %s5 = inlined_call_operand.vmem [shape: f32[32,1], index: 5, kind: input, shape index: {}]
  %s6 = inlined_call_operand.vmem [shape: f32[32,1], index: 6, kind: input, shape index: {}]
  %s7 = inlined_call_operand.vmem [shape: f32[2,32,8], index: 7, kind: output, shape index: {}]
  %s8 = sld [smem:[#allocation0]]
  $region61: #{feed_forward.3} parent=0
    _
  %s10 = ssub.s32 1, %s8
  %s11 = scalar_select 0, %s10, %s8
  loop: start=0, step=1, limit=4
  $region2: #{feed_forward.3} parent=0 // loop_pre_header
    _
  $region3: #{feed_forward.3} parent=0 // loop_header
    %s13 = sphi 0, %s17
    %p14 = scmp.ge.s32.totalorder %s13, 4
    %s20 = sphi 0, %s32
    %s21 = sphi 0, %s28
    %s22 = sphi 0, %s20
    %s23 = sphi 0, %s21
    %s24 = sphi 0, %s22
    %s25 = sphi 0, %s23
    %s37 = sphi 0, %s39
    %s40 = sphi 0, %s37
    %s41 = sphi 0, %s40
    %s57 = sphi 0, %s41
    %s61 = sphi 0, %s61
    %s63 = sphi 0, %s61
    %s64 = sphi 0, %s63
    %s78 = sphi 0, %s64
    %s82 = sphi 0, %s82
    %s84 = sphi 0, %s82
    %s85 = sphi 0, %s84
    %s99 = sphi 0, %s85
    %s103 = sphi 0, %s103
    %s105 = sphi 0, %s103
    %s106 = sphi 0, %s105
    %s120 = sphi 0, %s106
    %s124 = sphi 0, %s124
    %s126 = sphi 0, %s124
    %s127 = sphi 0, %s126
    %s141 = sphi 0, %s127
    %s145 = sphi 0, %s145
    %s147 = sphi 0, %s145
    %s148 = sphi 0, %s147
    %s162 = sphi 0, %s148
    %s166 = sphi 0, %s166
    %s168 = sphi 0, %s166
    %s169 = sphi 0, %s168
    %s183 = sphi 0, %s169
    %s191 = sphi 0, %s193
    %s194 = sphi 0, %s191
    %s195 = sphi 0, %s194
    %s211 = sphi 0, %s195
  $region4: #{feed_forward.3} parent=0 // loop_header_branch
    %16 = sbr.rel (%p14) target = $region8
  $region5: #{feed_forward.3} parent=0 // loop_body
    %s18 = ssub.s32 %s13, 1
    %s19 = ssub.s32 %s13, 2
    %s26 = sadd.s32 1, %s21
    %p27 = scmp.ge.s32.totalorder %s26, 1
    %s28 = scalar_select %p27, 0, %s26
    %s29 = sadd.s32 1, %s20
    %s30 = scalar_select %p27, %s29, %s20
    %p31 = scmp.ge.s32.totalorder %s30, 2
    %s32 = scalar_select %p31, 0, %s30
    %s33 = ssub.s32 %s20, %s32
    %s34 = ssub.s32 %s21, %s28
    %s35 = sor.u32 %s33, %s34
    %p36 = scmp.eq.s32.totalorder %s35, 0
    %s38 = sadd.s32 %s37, 1
    %s39 = scalar_select %p36, %s37, %s38
    %p42 = pneg %p36
    %p43 = scmp.eq.s32.totalorder %s13, 1
    %p44 = por %p42, %p43
    %p45 = scmp.ne.s32.totalorder %s37, %s40
    %p46 = scmp.eq.s32.totalorder %s13, 0
    %p47 = por %p45, %p46
    %p48 = scmp.ne.s32.totalorder %s37, %s40
    %p49 = scmp.eq.s32.totalorder %s18, 1
    %p50 = por %p48, %p49
    %p51 = scmp.ne.s32.totalorder %s40, %s41
    %p52 = scmp.eq.s32.totalorder %s18, 0
    %p53 = por %p51, %p52
    %p54 = scmp.ne.s32.totalorder %s40, %s41
    %p55 = scmp.eq.s32.totalorder %s19, 1
    %p56 = por %p54, %p55
    %p58 = scmp.ne.s32.totalorder %s41, %s57
    %p59 = scmp.eq.s32.totalorder %s19, 0
    %p60 = por %p58, %p59
    %s62 = sadd.s32 %s61, 1
    %p65 = scmp.eq.s32.totalorder %s13, 1
    %p66 = scmp.ne.s32.totalorder %s61, %s63
    %p67 = scmp.eq.s32.totalorder %s13, 0
    %p68 = por %p66, %p67
    %p69 = scmp.ne.s32.totalorder %s61, %s63
    %p70 = scmp.eq.s32.totalorder %s18, 1
    %p71 = por %p69, %p70
    %p72 = scmp.ne.s32.totalorder %s63, %s64
    %p73 = scmp.eq.s32.totalorder %s18, 0
    %p74 = por %p72, %p73
    %p75 = scmp.ne.s32.totalorder %s63, %s64
    %p76 = scmp.eq.s32.totalorder %s19, 1
    %p77 = por %p75, %p76
    %p79 = scmp.ne.s32.totalorder %s64, %s78
    %p80 = scmp.eq.s32.totalorder %s19, 0
    %p81 = por %p79, %p80
    %s83 = sadd.s32 %s82, 1
    %p86 = scmp.eq.s32.totalorder %s13, 1
    %p87 = scmp.ne.s32.totalorder %s82, %s84
    %p88 = scmp.eq.s32.totalorder %s13, 0
    %p89 = por %p87, %p88
    %p90 = scmp.ne.s32.totalorder %s82, %s84
    %p91 = scmp.eq.s32.totalorder %s18, 1
    %p92 = por %p90, %p91
    %p93 = scmp.ne.s32.totalorder %s84, %s85
    %p94 = scmp.eq.s32.totalorder %s18, 0
    %p95 = por %p93, %p94
    %p96 = scmp.ne.s32.totalorder %s84, %s85
    %p97 = scmp.eq.s32.totalorder %s19, 1
    %p98 = por %p96, %p97
    %p100 = scmp.ne.s32.totalorder %s85, %s99
    %p101 = scmp.eq.s32.totalorder %s19, 0
    %p102 = por %p100, %p101
    %s104 = sadd.s32 %s103, 1
    %p107 = scmp.eq.s32.totalorder %s13, 1
    %p108 = scmp.ne.s32.totalorder %s103, %s105
    %p109 = scmp.eq.s32.totalorder %s13, 0
    %p110 = por %p108, %p109
    %p111 = scmp.ne.s32.totalorder %s103, %s105
    %p112 = scmp.eq.s32.totalorder %s18, 1
    %p113 = por %p111, %p112
    %p114 = scmp.ne.s32.totalorder %s105, %s106
    %p115 = scmp.eq.s32.totalorder %s18, 0
    %p116 = por %p114, %p115
    %p117 = scmp.ne.s32.totalorder %s105, %s106
    %p118 = scmp.eq.s32.totalorder %s19, 1
    %p119 = por %p117, %p118
    %p121 = scmp.ne.s32.totalorder %s106, %s120
    %p122 = scmp.eq.s32.totalorder %s19, 0
    %p123 = por %p121, %p122
    %s125 = sadd.s32 %s124, 1
    %p128 = scmp.eq.s32.totalorder %s13, 1
    %p129 = scmp.ne.s32.totalorder %s124, %s126
    %p130 = scmp.eq.s32.totalorder %s13, 0
    %p131 = por %p129, %p130
    %p132 = scmp.ne.s32.totalorder %s124, %s126
    %p133 = scmp.eq.s32.totalorder %s18, 1
    %p134 = por %p132, %p133
    %p135 = scmp.ne.s32.totalorder %s126, %s127
    %p136 = scmp.eq.s32.totalorder %s18, 0
    %p137 = por %p135, %p136
    %p138 = scmp.ne.s32.totalorder %s126, %s127
    %p139 = scmp.eq.s32.totalorder %s19, 1
    %p140 = por %p138, %p139
    %p142 = scmp.ne.s32.totalorder %s127, %s141
    %p143 = scmp.eq.s32.totalorder %s19, 0
    %p144 = por %p142, %p143
    %s146 = sadd.s32 %s145, 1
    %p149 = scmp.eq.s32.totalorder %s13, 1
    %p150 = scmp.ne.s32.totalorder %s145, %s147
    %p151 = scmp.eq.s32.totalorder %s13, 0
    %p152 = por %p150, %p151
    %p153 = scmp.ne.s32.totalorder %s145, %s147
    %p154 = scmp.eq.s32.totalorder %s18, 1
    %p155 = por %p153, %p154
    %p156 = scmp.ne.s32.totalorder %s147, %s148
    %p157 = scmp.eq.s32.totalorder %s18, 0
    %p158 = por %p156, %p157
    %p159 = scmp.ne.s32.totalorder %s147, %s148
    %p160 = scmp.eq.s32.totalorder %s19, 1
    %p161 = por %p159, %p160
    %p163 = scmp.ne.s32.totalorder %s148, %s162
    %p164 = scmp.eq.s32.totalorder %s19, 0
    %p165 = por %p163, %p164
    %s167 = sadd.s32 %s166, 1
    %p170 = scmp.eq.s32.totalorder %s13, 1
    %p171 = scmp.ne.s32.totalorder %s166, %s168
    %p172 = scmp.eq.s32.totalorder %s13, 0
    %p173 = por %p171, %p172
    %p174 = scmp.ne.s32.totalorder %s166, %s168
    %p175 = scmp.eq.s32.totalorder %s18, 1
    %p176 = por %p174, %p175
    %p177 = scmp.ne.s32.totalorder %s168, %s169
    %p178 = scmp.eq.s32.totalorder %s18, 0
    %p179 = por %p177, %p178
    %p180 = scmp.ne.s32.totalorder %s168, %s169
    %p181 = scmp.eq.s32.totalorder %s19, 1
    %p182 = por %p180, %p181
    %p184 = scmp.ne.s32.totalorder %s169, %s183
    %p185 = scmp.eq.s32.totalorder %s19, 0
    %p186 = por %p184, %p185
    %s187 = ssub.s32 %s20, %s32
    %s188 = ssub.s32 %s21, %s28
    %s189 = sor.u32 %s187, %s188
    %p190 = scmp.eq.s32.totalorder %s189, 0
    %s192 = sadd.s32 %s191, 1
    %s193 = scalar_select %p190, %s191, %s192
    %p196 = pneg %p190
    %p197 = scmp.eq.s32.totalorder %s13, 1
    %p198 = por %p196, %p197
    %p199 = scmp.ne.s32.totalorder %s191, %s194
    %p200 = scmp.eq.s32.totalorder %s13, 0
    %p201 = por %p199, %p200
    %p202 = scmp.ne.s32.totalorder %s191, %s194
    %p203 = scmp.eq.s32.totalorder %s18, 1
    %p204 = por %p202, %p203
    %p205 = scmp.ne.s32.totalorder %s194, %s195
    %p206 = scmp.eq.s32.totalorder %s18, 0
    %p207 = por %p205, %p206
    %p208 = scmp.ne.s32.totalorder %s194, %s195
    %p209 = scmp.eq.s32.totalorder %s19, 1
    %p210 = por %p208, %p209
    %p212 = scmp.ne.s32.totalorder %s195, %s211
    %p213 = scmp.eq.s32.totalorder %s19, 0
    %p214 = por %p212, %p213
    %p215 = scmp.le.s32.totalorder 1, %s13
    %p216 = scmp.lt.s32.totalorder %s13, 3
    %p217 = pnand %p215, %p216
    %p218 = pneg %p217
    // Predicated region
    $region9: #{feed_forward.3} parent=5 // pred_check
      _
    $region10: #{feed_forward.3} parent=5 // pred_check_branch
      %220 = sbr.rel (%p217) target = $region12
    $region11: #{feed_forward.3} parent=5 // pred_region
      %s221 = ssub.s32 %s13, 1
      // Predicated region
      $region13: #{feed_forward.3} parent=11 // pred_check
        %p222 = pneg %p74
      $region14: #{feed_forward.3} parent=11 // pred_check_branch
        %224 = sbr.rel (%p222) target = $region16
      $region15: #{feed_forward.3} parent=11 // pred_region
        _
      $region16: #{feed_forward.3} parent=11 // pred_fallthru
        _
      // Predicated region
      $region17: #{feed_forward.3} parent=11 // pred_check
        %p225 = pneg %p95
      $region18: #{feed_forward.3} parent=11 // pred_check_branch
        %227 = sbr.rel (%p225) target = $region20
      $region19: #{feed_forward.3} parent=11 // pred_region
        _
      $region20: #{feed_forward.3} parent=11 // pred_fallthru
        _
      // Predicated region
      $region21: #{feed_forward.3} parent=11 // pred_check
        %p228 = pneg %p116
      $region22: #{feed_forward.3} parent=11 // pred_check_branch
        %230 = sbr.rel (%p228) target = $region24
      $region23: #{feed_forward.3} parent=11 // pred_region
        _
      $region24: #{feed_forward.3} parent=11 // pred_fallthru
        _
      // Predicated region
      $region25: #{feed_forward.3} parent=11 // pred_check
        %p231 = pneg %p137
      $region26: #{feed_forward.3} parent=11 // pred_check_branch
        %233 = sbr.rel (%p231) target = $region28
      $region27: #{feed_forward.3} parent=11 // pred_region
        _
      $region28: #{feed_forward.3} parent=11 // pred_fallthru
        _
      // Predicated region
      $region29: #{feed_forward.3} parent=11 // pred_check
        %p234 = pneg %p158
      $region30: #{feed_forward.3} parent=11 // pred_check_branch
        %236 = sbr.rel (%p234) target = $region32
      $region31: #{feed_forward.3} parent=11 // pred_region
        _
      $region32: #{feed_forward.3} parent=11 // pred_fallthru
        _
      // Predicated region
      $region33: #{feed_forward.3} parent=11 // pred_check
        %p237 = pneg %p179
      $region34: #{feed_forward.3} parent=11 // pred_check_branch
        %239 = sbr.rel (%p237) target = $region36
      $region35: #{feed_forward.3} parent=11 // pred_region
        _
      $region36: #{feed_forward.3} parent=11 // pred_fallthru
        _
    $region12: #{feed_forward.3} parent=5 // pred_fallthru
      _
    %p240 = scmp.lt.s32.totalorder %s13, 2
    // Predicated region
    $region37: #{feed_forward.3} parent=5 // pred_check
      %p241 = pneg %p240
    $region38: #{feed_forward.3} parent=5 // pred_check_branch
      %243 = sbr.rel (%p241) target = $region40
    $region39: #{feed_forward.3} parent=5 // pred_region
      // Predicated region
      $region41: #{feed_forward.3} parent=39 // pred_check
        %p244 = pneg %p47
      $region42: #{feed_forward.3} parent=39 // pred_check_branch
        %246 = sbr.rel (%p244) target = $region44
      $region43: #{feed_forward.3} parent=39 // pred_region
        %p247 = scmp.lt.s32.totalorder %s20, 1
        %s248 = scalar_select %p247, %s20, 1
        %p249 = scmp.lt.s32.totalorder %s21, 0
        %s250 = scalar_select %p249, %s21, 0
        %s251 = smul.addr %s248, 4
        %s252 = sadd.s32 %s250, %s251
        %s253 = smul.addr %s252, 8
        %s254 = scalar_lea.vmem %s0, %s253
      $region44: #{feed_forward.3} parent=39 // pred_fallthru
        _
    $region40: #{feed_forward.3} parent=5 // pred_fallthru
      _
    %p255 = scmp.le.s32.totalorder 1, %s13
    %p256 = scmp.lt.s32.totalorder %s13, 3
    %p257 = pnand %p255, %p256
    %p258 = pneg %p257
    // Predicated region
    $region45: #{feed_forward.3} parent=5 // pred_check
      _
    $region46: #{feed_forward.3} parent=5 // pred_check_branch
      %260 = sbr.rel (%p257) target = $region48
    $region47: #{feed_forward.3} parent=5 // pred_region
      %s261 = ssub.s32 %s13, 1
      %p262 = scmp.lt.s32.totalorder %s22, 1
      %s263 = scalar_select %p262, %s22, 1
      %p264 = scmp.lt.s32.totalorder %s23, 0
      %s265 = scalar_select %p264, %s23, 0
      %s266 = smul.addr %s263, 4
      %s267 = sadd.s32 %s265, %s266
      %s268 = smul.addr %s267, 8
      %s269 = scalar_lea.vmem %s0, %s268
      %p270 = pneg %p53
      %p271 = pneg %p50
      %p272 = pneg %p74
      %p273 = pneg %p71
      %p274 = pneg %p95
      %p275 = pneg %p92
      %p276 = pneg %p116
      %p277 = pneg %p113
      %p278 = pneg %p137
      %p279 = pneg %p134
      %p280 = pneg %p158
      %p281 = pneg %p155
      %p282 = pneg %p179
      %p283 = pneg %p176
      %p284 = pneg %p207
      %p285 = pneg %p204
      %p286 = scmp.lt.s32.totalorder %s22, 1
      %s287 = scalar_select %p286, %s22, 1
      %p288 = scmp.lt.s32.totalorder %s23, 0
      %s289 = scalar_select %p288, %s23, 0
      %s290 = smul.addr %s287, 4
      %s291 = sadd.s32 %s289, %s290
      %s292 = smul.addr %s291, 8
      %s293 = scalar_lea.vmem %s7, %s292
      %p294 = scmp.lt.s32.totalorder %s22, 1
      %s295 = scalar_select %p294, %s22, 1
      %p296 = scmp.lt.s32.totalorder %s23, 0
      %s297 = scalar_select %p296, %s23, 0
      %s298 = smul.addr %s295, 4
      %s299 = sadd.s32 %s297, %s298
      %s300 = smul.addr %s299, 8
      %s301 = scalar_lea.vmem %s0, %s300
      %p302 = scmp.lt.s32.totalorder %s22, 1
      %s303 = scalar_select %p302, %s22, 1
      %p304 = scmp.lt.s32.totalorder %s23, 0
      %s305 = scalar_select %p304, %s23, 0
      %s306 = smul.addr %s303, 4
      %s307 = sadd.s32 %s305, %s306
      %s308 = smul.addr %s307, 8
      %s309 = scalar_lea.vmem %s7, %s308
      %v311 = vld [vmem:[%s301] sm:$0xff]
      %v312 = vld [vmem:[%s301 + $0x8] sm:$0xff]
      %v313 = vld [vmem:[%s301 + $0x10] sm:$0xff]
      %v314 = vld [vmem:[%s301 + $0x18] sm:$0xff]
      %v315 = vld [vmem:[%s1] sm:$0xf]
      %v316 = vld [vmem:[%s1 + $0x4] sm:$0xf]
      %v317 = vld [vmem:[%s1 + $0x8] sm:$0xf]
      %v318 = vld [vmem:[%s1 + $0xc] sm:$0xf]
      %v319 = vld [vmem:[%s1 + $0x10] sm:$0xf]
      %v320 = vld [vmem:[%s1 + $0x14] sm:$0xf]
      %v321 = vld [vmem:[%s1 + $0x18] sm:$0xf]
      %v322 = vld [vmem:[%s1 + $0x1c] sm:$0xf]
      %v323 = vpack.c.bf16 %v312, %v311
      %v324 = vpack.c.bf16 %v314, %v313
      %v325 = vld [vmem:[%s2] sm:$0xff]
      %v326 = vld [vmem:[%s2 + $0x8] sm:$0xff]
      %v327 = vld [vmem:[%s2 + $0x10] sm:$0xff]
      %v328 = vld [vmem:[%s2 + $0x18] sm:$0xff]
      %v329 = vld [vmem:[%s2 + $0x20] sm:$0xff]
      %v330 = vld [vmem:[%s2 + $0x28] sm:$0xff]
      %v331 = vld [vmem:[%s2 + $0x30] sm:$0xff]
      %v332 = vld [vmem:[%s2 + $0x38] sm:$0xff]
      %334 = vset.pattern.permute.xlu0 0
      %335 = vperm.xlu0 %334, %v325
      %v336 = vpop.permute.xlu0 %335
      %339 = vset.pattern.permute.xlu0 0
      %340 = vperm.xlu0 %339, %v326
      %v341 = vpop.permute.xlu0 %340
      %344 = vset.pattern.permute.xlu0 0
      %345 = vperm.xlu0 %344, %v327
      %v346 = vpop.permute.xlu0 %345
      %349 = vset.pattern.permute.xlu0 0
      %350 = vperm.xlu0 %349, %v328
      %v351 = vpop.permute.xlu0 %350
      %354 = vset.pattern.permute.xlu0 0
      %355 = vperm.xlu0 %354, %v329
      %v356 = vpop.permute.xlu0 %355
      %359 = vset.pattern.permute.xlu0 0
      %360 = vperm.xlu0 %359, %v330
      %v361 = vpop.permute.xlu0 %360
      %364 = vset.pattern.permute.xlu0 0
      %365 = vperm.xlu0 %364, %v331
      %v366 = vpop.permute.xlu0 %365
      %369 = vset.pattern.permute.xlu0 0
      %370 = vperm.xlu0 %369, %v332
      %v371 = vpop.permute.xlu0 %370
      %v381 = vunpack.c.l.b16 %v315
      %v382 = vunpack.c.l.b16 %v316
      %v383 = vunpack.c.l.b16 %v317
      %v384 = vunpack.c.l.b16 %v318
      %v385 = vunpack.c.l.b16 %v319
      %v386 = vunpack.c.l.b16 %v320
      %v387 = vunpack.c.l.b16 %v321
      %v388 = vunpack.c.l.b16 %v322
      %v389 = vpack.c.b16 %v382, %v381
      %v390 = vpack.c.b16 %v384, %v383
      %v391 = vpack.c.b16 %v386, %v385
      %v392 = vpack.c.b16 %v388, %v387
      %vm393 = vcmask 261120
      %v395 = vsel %vm393, %v389, 0
      %v398 = vsel %vm393, %v390, 0
      %v401 = vsel %vm393, %v391, 0
      %v404 = vsel %vm393, %v392, 0
      %406 = vmatprep.subr.bf16.mxu0 0
      %407 = vmatpush1.bf16.msra.mxu0 %v323
      %408 = vmatprep.subr.bf16.mxu0 0
      %409 = vmatpush1.bf16.msra.mxu0 %v324
      %410 = vmatprep.subr.bf16.mxu0 0
      %411 = vmatpush1.bf16.msra.mxu0 0
      %412 = vmatprep.subr.bf16.mxu0 0
      %413 = vmatpush1.bf16.msra.mxu0 0
      %414 = vmatprep.subr.bf16.mxu0 0
      %415 = vmatpush1.bf16.msra.mxu0 0
      %416 = vmatprep.subr.bf16.mxu0 0
      %417 = vmatpush1.bf16.msra.mxu0 0
      %418 = vmatprep.subr.bf16.mxu0 0
      %419 = vmatpush1.bf16.msra.mxu0 0
      %420 = vmatprep.subr.bf16.mxu0 0
      %421 = vmatpush1.bf16.msra.mxu0 0
      %422 = vmatprep.subr.bf16.mxu0 0
      %423 = vmatpush1.bf16.msra.mxu0 0
      %424 = vmatprep.subr.bf16.mxu0 0
      %425 = vmatpush1.bf16.msra.mxu0 0
      %426 = vmatprep.subr.bf16.mxu0 0
      %427 = vmatpush1.bf16.msra.mxu0 0
      %428 = vmatprep.subr.bf16.mxu0 0
      %429 = vmatpush1.bf16.msra.mxu0 0
      %430 = vmatprep.subr.bf16.mxu0 0
      %431 = vmatpush1.bf16.msra.mxu0 0
      %432 = vmatprep.subr.bf16.mxu0 0
      %433 = vmatpush1.bf16.msra.mxu0 0
      %434 = vmatprep.subr.bf16.mxu0 0
      %435 = vmatpush1.bf16.msra.mxu0 0
      %436 = vmatprep.subr.bf16.mxu0 0
      %437 = vmatpush1.bf16.msra.mxu0 0
      %438 = vmatprep.mubr.bf16.mxu0 0
      %439 = vmatmul.mubr.bf16.gmra.mrb[0].mxu0 %v395
      %v440 = vpop.f32.mrb[0].mxu0
      %v441 = vadd.f32 %v336, %v440
      %v442 = vpop.f32.mrb[0].mxu0
      %v443 = vpop.f32.mrb[0].mxu0
      %v444 = vadd.f32 %v341, %v443
      %v445 = vpop.f32.mrb[0].mxu0
      %446 = vmatprep.mubr.bf16.mxu0 0
      %447 = vmatmul.mubr.bf16.gmra.mrb[0].mxu0 %v398
      %v448 = vpop.f32.mrb[0].mxu0
      %v449 = vadd.f32 %v346, %v448
      %v450 = vpop.f32.mrb[0].mxu0
      %v451 = vpop.f32.mrb[0].mxu0
      %v452 = vadd.f32 %v351, %v451
      %v453 = vpop.f32.mrb[0].mxu0
      %454 = vmatprep.mubr.bf16.mxu0 0
      %455 = vmatmul.mubr.bf16.gmra.mrb[0].mxu0 %v401
      %v456 = vpop.f32.mrb[0].mxu0
      %v457 = vadd.f32 %v356, %v456
      %v458 = vpop.f32.mrb[0].mxu0
      %v459 = vpop.f32.mrb[0].mxu0
      %v460 = vadd.f32 %v361, %v459
      %v461 = vpop.f32.mrb[0].mxu0
      %462 = vmatprep.mubr.bf16.mxu0 0
      %463 = vmatmul.mubr.bf16.gmra.mrb[0].mxu0 %v404
      %v464 = vpop.f32.mrb[0].mxu0
      %v465 = vadd.f32 %v366, %v464
      %v466 = vpop.f32.mrb[0].mxu0
      %v467 = vpop.f32.mrb[0].mxu0
      %v468 = vadd.f32 %v371, %v467
      %v469 = vpop.f32.mrb[0].mxu0
      %470 = vdwg.mxu0
      %v471 = vmax.f32 %v441, 0.0
      %v472 = vmax.f32 %v444, 0.0
      %v473 = vmax.f32 %v449, 0.0
      %v474 = vmax.f32 %v452, 0.0
      %v475 = vmax.f32 %v457, 0.0
      %v476 = vmax.f32 %v460, 0.0
      %v477 = vmax.f32 %v465, 0.0
      %v478 = vmax.f32 %v468, 0.0
      %v479 = vld [vmem:[%s3] sm:$0xf]
      %v480 = vld [vmem:[%s3 + $0x4] sm:$0xf]
      %v481 = vld [vmem:[%s3 + $0x8] sm:$0xf]
      %v482 = vld [vmem:[%s3 + $0xc] sm:$0xf]
      %v483 = vpack.c.bf16 %v472, %v471
      %v484 = vpack.c.bf16 %v474, %v473
      %v485 = vpack.c.bf16 %v476, %v475
      %v486 = vpack.c.bf16 %v478, %v477
      %v487 = vld [vmem:[%s4] sm:$0xff]
      %v488 = vld [vmem:[%s4 + $0x8] sm:$0xff]
      %v489 = vld [vmem:[%s4 + $0x10] sm:$0xff]
      %v490 = vld [vmem:[%s4 + $0x18] sm:$0xff]
      %492 = vset.pattern.permute.xlu0 0
      %493 = vperm.xlu0 %492, %v487
      %v494 = vpop.permute.xlu0 %493
      %497 = vset.pattern.permute.xlu0 0
      %498 = vperm.xlu0 %497, %v488
      %v499 = vpop.permute.xlu0 %498
      %502 = vset.pattern.permute.xlu0 0
      %503 = vperm.xlu0 %502, %v489
      %v504 = vpop.permute.xlu0 %503
      %507 = vset.pattern.permute.xlu0 0
      %508 = vperm.xlu0 %507, %v490
      %v509 = vpop.permute.xlu0 %508
      %v515 = vunpack.c.l.b16 %v479
      %v516 = vunpack.c.l.b16 %v480
      %v517 = vunpack.c.l.b16 %v481
      %v518 = vunpack.c.l.b16 %v482
      %v519 = vpack.c.b16 %v516, %v515
      %v520 = vpack.c.b16 %v518, %v517
      %vm521 = vcmask 523264
      %v523 = vsel %vm521, %v519, 0
      %v526 = vsel %vm521, %v520, 0
      %528 = vmatprep.subr.bf16.mxu0 0
      %529 = vmatpush1.bf16.msra.mxu0 %v483
      %530 = vmatprep.subr.bf16.mxu0 0
      %531 = vmatpush1.bf16.msra.mxu0 %v484
      %532 = vmatprep.subr.bf16.mxu0 0
      %533 = vmatpush1.bf16.msra.mxu0 %v485
      %534 = vmatprep.subr.bf16.mxu0 0
      %535 = vmatpush1.bf16.msra.mxu0 %v486
      %536 = vmatprep.subr.bf16.mxu0 0
      %537 = vmatpush1.bf16.msra.mxu0 0
      %538 = vmatprep.subr.bf16.mxu0 0
      %539 = vmatpush1.bf16.msra.mxu0 0
      %540 = vmatprep.subr.bf16.mxu0 0
      %541 = vmatpush1.bf16.msra.mxu0 0
      %542 = vmatprep.subr.bf16.mxu0 0
      %543 = vmatpush1.bf16.msra.mxu0 0
      %544 = vmatprep.subr.bf16.mxu0 0
      %545 = vmatpush1.bf16.msra.mxu0 0
      %546 = vmatprep.subr.bf16.mxu0 0
      %547 = vmatpush1.bf16.msra.mxu0 0
      %548 = vmatprep.subr.bf16.mxu0 0
      %549 = vmatpush1.bf16.msra.mxu0 0
      %550 = vmatprep.subr.bf16.mxu0 0
      %551 = vmatpush1.bf16.msra.mxu0 0
      %552 = vmatprep.subr.bf16.mxu0 0
      %553 = vmatpush1.bf16.msra.mxu0 0
      %554 = vmatprep.subr.bf16.mxu0 0
      %555 = vmatpush1.bf16.msra.mxu0 0
      %556 = vmatprep.subr.bf16.mxu0 0
      %557 = vmatpush1.bf16.msra.mxu0 0
      %558 = vmatprep.subr.bf16.mxu0 0
      %559 = vmatpush1.bf16.msra.mxu0 0
      %560 = vmatprep.mubr.bf16.mxu0 0
      %561 = vmatmul.mubr.bf16.gmra.mrb[0].mxu0 %v523
      %v562 = vpop.f32.mrb[0].mxu0
      %v563 = vadd.f32 %v494, %v562
      %v564 = vpop.f32.mrb[0].mxu0
      %v565 = vpop.f32.mrb[0].mxu0
      %v566 = vadd.f32 %v499, %v565
      %v567 = vpop.f32.mrb[0].mxu0
      %568 = vmatprep.mubr.bf16.mxu0 0
      %569 = vmatmul.mubr.bf16.gmra.mrb[0].mxu0 %v526
      %v570 = vpop.f32.mrb[0].mxu0
      %v571 = vadd.f32 %v504, %v570
      %v572 = vpop.f32.mrb[0].mxu0
      %v573 = vpop.f32.mrb[0].mxu0
      %v574 = vadd.f32 %v509, %v573
      %v575 = vpop.f32.mrb[0].mxu0
      %576 = vdwg.mxu0
      %v577 = vadd.f32 %v563, %v311
      %v578 = vadd.f32 %v566, %v312
      %v579 = vadd.f32 %v571, %v313
      %v580 = vadd.f32 %v574, %v314
      %v581 = vld [vmem:[%s5] sm:$0xff]
      %v582 = vld [vmem:[%s5 + $0x8] sm:$0xff]
      %v583 = vld [vmem:[%s5 + $0x10] sm:$0xff]
      %v584 = vld [vmem:[%s5 + $0x18] sm:$0xff]
      %586 = vset.pattern.permute.xlu0 0
      %587 = vperm.xlu0 %586, %v581
      %v588 = vpop.permute.xlu0 %587
      %591 = vset.pattern.permute.xlu0 0
      %592 = vperm.xlu0 %591, %v582
      %v593 = vpop.permute.xlu0 %592
      %596 = vset.pattern.permute.xlu0 0
      %597 = vperm.xlu0 %596, %v583
      %v598 = vpop.permute.xlu0 %597
      %601 = vset.pattern.permute.xlu0 0
      %602 = vperm.xlu0 %601, %v584
      %v603 = vpop.permute.xlu0 %602
      %v605 = vmul.f32 %v577, %v588
      %v606 = vmul.f32 %v578, %v593
      %v607 = vmul.f32 %v579, %v598
      %v608 = vmul.f32 %v580, %v603
      %v609 = vld [vmem:[%s6] sm:$0xff]
      %v610 = vld [vmem:[%s6 + $0x8] sm:$0xff]
      %v611 = vld [vmem:[%s6 + $0x10] sm:$0xff]
      %v612 = vld [vmem:[%s6 + $0x18] sm:$0xff]
      %614 = vset.pattern.permute.xlu0 0
      %615 = vperm.xlu0 %614, %v609
      %v616 = vpop.permute.xlu0 %615
      %619 = vset.pattern.permute.xlu0 0
      %620 = vperm.xlu0 %619, %v610
      %v621 = vpop.permute.xlu0 %620
      %624 = vset.pattern.permute.xlu0 0
      %625 = vperm.xlu0 %624, %v611
      %v626 = vpop.permute.xlu0 %625
      %629 = vset.pattern.permute.xlu0 0
      %630 = vperm.xlu0 %629, %v612
      %v631 = vpop.permute.xlu0 %630
      %v633 = vadd.f32 %v605, %v616
      %v634 = vadd.f32 %v606, %v621
      %v635 = vadd.f32 %v607, %v626
      %v636 = vadd.f32 %v608, %v631
      %vm637 = vcmask 64512
      %638 = vst.msk [vmem:[%s309] sm:$0xff] %vm637, %v633
      %639 = vst.msk [vmem:[%s309 + $0x8] sm:$0xff] %vm637, %v634
      %640 = vst.msk [vmem:[%s309 + $0x10] sm:$0xff] %vm637, %v635
      %641 = vst.msk [vmem:[%s309 + $0x18] sm:$0xff] %vm637, %v636
      %p642 = scmp.lt.s32.totalorder %s22, 1
      %s643 = scalar_select %p642, %s22, 1
      %p644 = scmp.lt.s32.totalorder %s23, 0
      %s645 = scalar_select %p644, %s23, 0
      %s646 = smul.addr %s643, 4
      %s647 = sadd.s32 %s645, %s646
      %s648 = smul.addr %s647, 8
      %s649 = scalar_lea.vmem %s7, %s648
      // Predicated region
      $region49: #{feed_forward.3} parent=47 // pred_check
        %p650 = pneg %p204
      $region50: #{feed_forward.3} parent=47 // pred_check_branch
        %652 = sbr.rel (%p650) target = $region52
      $region51: #{feed_forward.3} parent=47 // pred_region
        _
      $region52: #{feed_forward.3} parent=47 // pred_fallthru
        _
    $region48: #{feed_forward.3} parent=5 // pred_fallthru
      _
    %p653 = scmp.le.s32.totalorder 2, %s13
    // Predicated region
    $region53: #{feed_forward.3} parent=5 // pred_check
      %p654 = pneg %p653
    $region54: #{feed_forward.3} parent=5 // pred_check_branch
      %656 = sbr.rel (%p654) target = $region56
    $region55: #{feed_forward.3} parent=5 // pred_region
      %s657 = ssub.s32 %s13, 2
      // Predicated region
      $region57: #{feed_forward.3} parent=55 // pred_check
        %p658 = pneg %p210
      $region58: #{feed_forward.3} parent=55 // pred_check_branch
        %660 = sbr.rel (%p658) target = $region60
      $region59: #{feed_forward.3} parent=55 // pred_region
        %p661 = scmp.lt.s32.totalorder %s24, 1
        %s662 = scalar_select %p661, %s24, 1
        %p663 = scmp.lt.s32.totalorder %s25, 0
        %s664 = scalar_select %p663, %s25, 0
        %s665 = smul.addr %s662, 4
        %s666 = sadd.s32 %s664, %s665
        %s667 = smul.addr %s666, 8
        %s668 = scalar_lea.vmem %s7, %s667
      $region60: #{feed_forward.3} parent=55 // pred_fallthru
        _
    $region56: #{feed_forward.3} parent=5 // pred_fallthru
      _
  $region6: #{feed_forward.3} parent=0 // loop_footer
    %s17 = sadd.s32 1, %s13
  $region7: #{feed_forward.3} parent=0 // loop_footer_branch
    %12 = sbr.rel target = $region3
  $region8: #{feed_forward.3} parent=0 // loop_exit
    _

</llo_original>
